<compile_context>
chip_gen: v5e
topology: v5e:2x2
jax: 0.10.0
libtpu: 0.0.40
codegen_flags: <defaults>
</compile_context>

<pallas_src>
import functools

import jax
import jax.numpy as jnp
from jax import lax
from jax.experimental import pallas as pl
from jax.experimental.pallas import tpu as pltpu

KSIZE = 7
PAD = KSIZE // 2


def _cdiv(a, b):
    return -(-a // b)


def _spatial_attention_kernel(x_ref, w_ref, o_ref,
                              sum_sc, max_sc, pad_sc, mrow_sc,
                              *, C, H, W, b_tile):
    """Grid = (batch-tile, channel-tile); lane axis = flattened H*W.

    x_ref   : (b_tile, c_tile, H*W) input block, native dtype.
    w_ref   : (2*7*7,) f32 conv weights in SMEM.
    o_ref   : (b_tile, 1, H*W) f32 output block (same block across channel axis).
    sum_sc  : (b_tile, H*W) f32 running channel sum.
    max_sc  : (b_tile, H*W) f32 running channel max.
    pad_sc  : (2, PADF + H*W + PADF) f32 zero-padded flat [avg, max] map.
    mrow_sc : (2, H*W + 6*W) f32 column-masked dw-shifted map (rebuilt per dw).
    """
    ci = pl.program_id(1)
    HW = H * W
    PADF = PAD * W + PAD              # flat halo covering +/-3 rows and cols
    EXT = HW + 2 * PAD * W            # extended domain for the row (dh) shifts

    # ---- fused single-pass channel reduction (f32 accumulate, no f32 temp) --
    blk = x_ref[...]                                           # native dtype
    psum = jnp.sum(blk, axis=1, dtype=jnp.float32)             # (b_tile, HW)
    pmax = jnp.max(blk, axis=1).astype(jnp.float32)            # (b_tile, HW)

    @pl.when(ci == 0)
    def _():
        sum_sc[...] = jnp.zeros(sum_sc.shape, jnp.float32)
        max_sc[...] = jnp.full(max_sc.shape, -jnp.inf, jnp.float32)
        # Zero only the flat halo, once per batch tile; the interior is fully
        # overwritten in the epilogue, so the halo stays zero across the b loop.
        pad_sc[:, 0:PADF] = jnp.zeros((2, PADF), jnp.float32)
        pad_sc[:, PADF + HW:PADF + HW + PADF] = jnp.zeros((2, PADF), jnp.float32)

    sum_sc[...] += psum
    max_sc[...] = jnp.maximum(max_sc[...], pmax)

    # ---- conv(7x7, pad=3) + sigmoid epilogue: once per batch tile -----------
    @pl.when(ci == pl.num_programs(1) - 1)
    def _():
        inv_c = 1.0 / C
        # Column index of every lane of the extended (dh-shift) domain.
        # (i + dh*W) mod W == i mod W, so this mask is valid for every dh.
        scol = lax.broadcasted_iota(jnp.int32, (1, EXT), 1) % W

        # TODO(synk): for very large feature maps (HW >= ~2048) chunk this
        # epilogue over HW to bound acc0/acc1 vreg pressure.
        for b in range(b_tile):
            pad_sc[0:1, PADF:PADF + HW] = sum_sc[b:b + 1, :] * inv_c   # mean
            pad_sc[1:2, PADF:PADF + HW] = max_sc[b:b + 1, :]           # max

            acc0 = jnp.zeros((1, HW), jnp.float32)
            acc1 = jnp.zeros((1, HW), jnp.float32)
            for dw in range(KSIZE):
                # valid iff 0 <= col + (dw - PAD) < W  -- one live mask only.
                ok = (scol >= PAD - dw) & (scol < W + PAD - dw)
                # Pre-masked, dw-shifted [avg, max] rows over the extended
                # domain: mrow_sc[c, s] = masked pad_sc[c, s + dw].
                mrow_sc[...] = jnp.where(ok, pad_sc[:, dw:dw + EXT], 0.0)
                for c in range(2):
                    for dh in range(KSIZE):
                        idx = c * KSIZE * KSIZE + dh * KSIZE + dw
                        wgt = w_ref[idx]                        # SMEM scalar
                        # output i needs pad_sc[c, i + dh*W + dw]  (masked)
                        tap = wgt * mrow_sc[c:c + 1, dh * W:dh * W + HW]
                        if idx % 2 == 0:
                            acc0 = acc0 + tap
                        else:
                            acc1 = acc1 + tap
            o_ref[b] = jax.nn.sigmoid(acc0 + acc1)


def _padded_block_bytes(b, c, hw, itemsize):
    """VMEM footprint of a (b, c, hw) block including sublane/lane padding."""
    sub = 8 * (4 // itemsize)                 # 8 f32, 16 bf16, 32 int8
    c_pad = _cdiv(c, sub) * sub
    hw_pad = _cdiv(hw, 128) * 128
    return b * c_pad * hw_pad * itemsize


def _choose_tiles(N, C, HW, itemsize, target_bytes=2 * 1024 * 1024):
    """Pick (b_tile, c_tile): biggest blocks whose *padded* VMEM footprint
    stays under target_bytes (comfortable double-buffering on v5e/v6e/v7x).
    c_tile is a sublane-aligned divisor of C (or == C); b_tile divides N and
    is capped so the 'parallel' batch axis keeps >= 2 steps (v7x megacore)
    and the unrolled per-batch epilogue stays bounded."""
    sub = 8 * (4 // itemsize)
    if _padded_block_bytes(1, C, HW, itemsize) <= target_bytes:
        c_tile = C
    else:
        c_tile = None
        for t in range(C - 1, 0, -1):
            if C % t or t % sub:
                continue
            if _padded_block_bytes(1, t, HW, itemsize) <= target_bytes:
                c_tile = t
                break
        if c_tile is None:
            # No aligned divisor fits the budget (huge HW / awkward C): take
            # the smallest aligned divisor; never silently blow the budget
            # with the full C unless C has no aligned divisor at all.
            aligned = [t for t in range(sub, C, sub) if C % t == 0]
            c_tile = aligned[0] if aligned else C

    b_tile = 1
    if c_tile == C and N > 1:
        max_b = min(8, max(1, N // 2))        # keep >= 2 parallel batch steps
        for t in range(max_b, 0, -1):
            if N % t == 0 and _padded_block_bytes(t, C, HW, itemsize) <= target_bytes:
                b_tile = t
                break
    return b_tile, c_tile


def spatial_attention(x, conv_weight):
    """x: (N, C, H, W) float dtype; conv_weight: (1, 2, 7, 7).
    Returns sigmoid(conv2d(cat([mean_c, max_c]), W, pad=3)) in f32, (N,1,H,W)."""
    N, C, H, W = x.shape
    HW = H * W

    # Lane-dense views (free reshapes on contiguous NCHW); native dtype in HBM.
    x_flat = x.reshape(N, C, HW)
    w_flat = conv_weight.reshape(2 * KSIZE * KSIZE).astype(jnp.float32)

    itemsize = x.dtype.itemsize
    b_tile, c_tile = _choose_tiles(N, C, HW, itemsize)
    n_b, n_c = N // b_tile, C // c_tile
    padf = PAD * W + PAD
    ext = HW + 2 * PAD * W

    # Deeper input pipelining only pays for small blocks on longer grids.
    block_bytes = _padded_block_bytes(b_tile, c_tile, HW, itemsize)
    n_bufs = 3 if (n_b * n_c >= 4 and block_bytes <= 512 * 1024) else 2
    x_spec_kwargs = {}
    if n_bufs == 3:
        x_spec_kwargs["pipeline_mode"] = pl.Buffered(3)
    x_spec = pl.BlockSpec((b_tile, c_tile, HW), lambda nb, ci: (nb, ci, 0),
                          **x_spec_kwargs)

    # Explicit, padding-aware VMEM budget (works under the 16/32/32 MiB scoped
    # defaults of v5e/v6e/v7x and v7x's 64 MiB physical VMEM).
    out_row_bytes = _padded_block_bytes(b_tile, 1, HW, 4)
    scratch_bytes = (2 * b_tile * (_cdiv(HW, 128) * 128)
                     + 2 * (_cdiv(HW + 2 * padf, 128) * 128)
                     + 2 * (_cdiv(ext, 128) * 128)) * 4
    est = n_bufs * block_bytes + 2 * out_row_bytes + scratch_bytes
    vmem_limit = int(min(32 * 1024 * 1024,
                         max(16 * 1024 * 1024, 2 * est + (2 << 20))))

    kernel = functools.partial(_spatial_attention_kernel,
                               C=C, H=H, W=W, b_tile=b_tile)

    # TODO(synk): for N == 1 on v7x, add a parallel HW-tile axis for the
    # reduction phase so both TensorCores stream HBM; single-TC v5e/v6e and
    # N >= 2 already use the 'parallel' batch axis.
    out = pl.pallas_call(
        kernel,
        out_shape=jax.ShapeDtypeStruct((N, 1, HW), jnp.float32),
        grid_spec=pltpu.PrefetchScalarGridSpec(
            num_scalar_prefetch=0,
            grid=(n_b, n_c),
            in_specs=[
                x_spec,
                pl.BlockSpec(memory_space=pltpu.MemorySpace.SMEM),
            ],
            out_specs=pl.BlockSpec((b_tile, 1, HW), lambda nb, ci: (nb, 0, 0)),
            scratch_shapes=[
                pltpu.VMEM((b_tile, HW), jnp.float32),            # running sum
                pltpu.VMEM((b_tile, HW), jnp.float32),            # running max
                pltpu.VMEM((2, HW + 2 * padf), jnp.float32),      # padded map
                pltpu.VMEM((2, ext), jnp.float32),                # masked rows
            ],
        ),
        compiler_params=pltpu.CompilerParams(
            dimension_semantics=("parallel", "arbitrary"),
            vmem_limit_bytes=vmem_limit),
    )(x_flat, w_flat)

    return out.reshape(N, 1, H, W)


def spatial_attention_ref(x, conv_weight):
    """Pure-JAX reference mirroring the PyTorch forward."""
    avg_out = jnp.mean(x, axis=1, keepdims=True)
    max_out = jnp.max(x, axis=1, keepdims=True)
    cat = jnp.concatenate([avg_out, max_out], axis=1)         # (N, 2, H, W)
    y = jax.lax.conv_general_dilated(
        cat, conv_weight,
        window_strides=(1, 1),
        padding=[(PAD, PAD), (PAD, PAD)],
        dimension_numbers=("NCHW", "OIHW", "NCHW"),
    )
    return jax.nn.sigmoid(y)


if __name__ == "__main__":
    key = jax.random.PRNGKey(0)
    kx, kw = jax.random.split(key)

    N, C, H, W = 2, 4, 16, 16
    x = jax.random.normal(kx, (N, C, H, W), dtype=jnp.float32)
    conv_weight = 0.1 * jax.random.normal(kw, (1, 2, KSIZE, KSIZE),
                                          dtype=jnp.float32)

    # f32 input (matches the PyTorch module's default dtype).
    out = jax.block_until_ready(spatial_attention(x, conv_weight))
    ref = spatial_attention_ref(x, conv_weight)
    assert out.shape == (N, 1, H, W)
    assert jnp.allclose(out, ref, atol=1e-5, rtol=1e-5), "f32 mismatch vs reference"

    # Native bf16 path: bf16 stays bf16 in HBM, f32 accumulation in-kernel.
    x_bf16 = x.astype(jnp.bfloat16)
    out_bf16 = jax.block_until_ready(spatial_attention(x_bf16, conv_weight))
    ref_bf16 = spatial_attention_ref(x_bf16.astype(jnp.float32), conv_weight)
    assert jnp.allclose(out_bf16, ref_bf16, atol=1e-4, rtol=1e-4), \
        "bf16 mismatch vs reference"

    print("KERNEL_OK")
</pallas_src>

<mosaic_0001>
module attributes {stable_mosaic.version = 11 : i64} {
  func.func @_spatial_attention_kernel(%arg0: i32, %arg1: i32, %arg2: memref<1x4x256xf32, #tpu.memory_space<vmem>>, %arg3: memref<98xf32, #tpu.memory_space<smem>>, %arg4: memref<1x1x256xf32, #tpu.memory_space<vmem>>, %arg5: memref<1x256xf32, #tpu.memory_space<vmem>>, %arg6: memref<1x256xf32, #tpu.memory_space<vmem>>, %arg7: memref<2x358xf32, #tpu.memory_space<vmem>>, %arg8: memref<2x352xf32, #tpu.memory_space<vmem>>) attributes {dimension_semantics = [#tpu.dimension_semantics<parallel>, #tpu.dimension_semantics<arbitrary>], iteration_bounds = array<i64: 2, 1>, scalar_prefetch = 0 : i64, scratch_operands = 4 : i64, tpu.core_type = #tpu.core_type<tc>, window_params = [{transform_indices = @transform_0, window_bounds = array<i64: 1, 4, 256>}, {transform_indices = @transform_1, window_bounds = array<i64: 98>}, {transform_indices = @transform_2, window_bounds = array<i64: 1, 1, 256>}]} {
    %c0 = arith.constant 0 : index
    %c0_0 = arith.constant 0 : index
    %c0_1 = arith.constant 0 : index
    %0 = vector.load %arg2[%c0, %c0_0, %c0_1] : memref<1x4x256xf32, #tpu.memory_space<vmem>>, vector<1x4x256xf32>
    %cst = arith.constant dense<0.000000e+00> : vector<1x256xf32>
    %1 = vector.multi_reduction <add>, %0, %cst [1] : vector<1x4x256xf32> to vector<1x256xf32>
    %cst_2 = arith.constant dense<0xFF800000> : vector<1x256xf32>
    %2 = vector.multi_reduction <maximumf>, %0, %cst_2 [1] : vector<1x4x256xf32> to vector<1x256xf32>
    %c0_i32 = arith.constant 0 : i32
    %3 = arith.cmpi eq, %arg1, %c0_i32 : i32
    %4 = arith.extui %3 : i1 to i32
    %c0_i32_3 = arith.constant 0 : i32
    %5 = arith.cmpi ne, %4, %c0_i32_3 : i32
    scf.if %5 {
      %cst_14 = arith.constant 0.000000e+00 : f32
      %15 = vector.broadcast %cst_14 : f32 to vector<1x256xf32>
      %c0_15 = arith.constant 0 : index
      %c0_16 = arith.constant 0 : index
      %16 = vector.load %arg5[%c0_15, %c0_16] : memref<1x256xf32, #tpu.memory_space<vmem>>, vector<1x256xf32>
      tpu.vector_store %arg5[%c0_15, %c0_16], %15 {strides = array<i32>} : memref<1x256xf32, #tpu.memory_space<vmem>>, vector<1x256xf32>,
      %cst_17 = arith.constant 0xFF800000 : f32
      %17 = vector.broadcast %cst_17 : f32 to vector<1x256xf32>
      %c0_18 = arith.constant 0 : index
      %c0_19 = arith.constant 0 : index
      %18 = vector.load %arg6[%c0_18, %c0_19] : memref<1x256xf32, #tpu.memory_space<vmem>>, vector<1x256xf32>
      tpu.vector_store %arg6[%c0_18, %c0_19], %17 {strides = array<i32>} : memref<1x256xf32, #tpu.memory_space<vmem>>, vector<1x256xf32>,
      %cst_20 = arith.constant 0.000000e+00 : f32
      %19 = vector.broadcast %cst_20 : f32 to vector<2x51xf32>
      %c0_21 = arith.constant 0 : index
      %c0_22 = arith.constant 0 : index
      %20 = vector.load %arg7[%c0_21, %c0_22] : memref<2x358xf32, #tpu.memory_space<vmem>>, vector<2x51xf32>
      tpu.vector_store %arg7[%c0_21, %c0_22], %19 {strides = array<i32>} : memref<2x358xf32, #tpu.memory_space<vmem>>, vector<2x51xf32>,
      %cst_23 = arith.constant 0.000000e+00 : f32
      %21 = vector.broadcast %cst_23 : f32 to vector<2x51xf32>
      %c0_24 = arith.constant 0 : index
      %c307 = arith.constant 307 : index
      %22 = vector.load %arg7[%c0_24, %c307] : memref<2x358xf32, #tpu.memory_space<vmem>>, vector<2x51xf32>
      tpu.vector_store %arg7[%c0_24, %c307], %21 {strides = array<i32>} : memref<2x358xf32, #tpu.memory_space<vmem>>, vector<2x51xf32>,
    } else {
    }
    %c0_4 = arith.constant 0 : index
    %c0_5 = arith.constant 0 : index
    %6 = vector.load %arg5[%c0_4, %c0_5] : memref<1x256xf32, #tpu.memory_space<vmem>>, vector<1x256xf32>
    %7 = arith.addf %6, %1 : vector<1x256xf32>
    %c0_6 = arith.constant 0 : index
    %c0_7 = arith.constant 0 : index
    %8 = vector.load %arg5[%c0_6, %c0_7] : memref<1x256xf32, #tpu.memory_space<vmem>>, vector<1x256xf32>
    tpu.vector_store %arg5[%c0_6, %c0_7], %7 {strides = array<i32>} : memref<1x256xf32, #tpu.memory_space<vmem>>, vector<1x256xf32>,
    %c0_8 = arith.constant 0 : index
    %c0_9 = arith.constant 0 : index
    %9 = vector.load %arg6[%c0_8, %c0_9] : memref<1x256xf32, #tpu.memory_space<vmem>>, vector<1x256xf32>
    %10 = arith.maximumf %9, %2 : vector<1x256xf32>
    %c0_10 = arith.constant 0 : index
    %c0_11 = arith.constant 0 : index
    %11 = vector.load %arg6[%c0_10, %c0_11] : memref<1x256xf32, #tpu.memory_space<vmem>>, vector<1x256xf32>
    tpu.vector_store %arg6[%c0_10, %c0_11], %10 {strides = array<i32>} : memref<1x256xf32, #tpu.memory_space<vmem>>, vector<1x256xf32>,
    %c0_i32_12 = arith.constant 0 : i32
    %12 = arith.cmpi eq, %arg1, %c0_i32_12 : i32
    %13 = arith.extui %12 : i1 to i32
    %c0_i32_13 = arith.constant 0 : i32
    %14 = arith.cmpi ne, %13, %c0_i32_13 : i32
    scf.if %14 {
      %15 = tpu.iota {dimensions = array<i32: 1>} : vector<1x352xi32>
      %c16_i32 = arith.constant 16 : i32
      %c0_i32_14 = arith.constant 0 : i32
      %16 = arith.cmpi eq, %c16_i32, %c0_i32_14 : i32
      %c1_i32 = arith.constant 1 : i32
      %17 = arith.select %16, %c1_i32, %c16_i32 : i32
      %18 = vector.broadcast %17 : i32 to vector<1x352xi32>
      %19 = arith.remsi %15, %18 : vector<1x352xi32>
      %c0_i32_15 = arith.constant 0 : i32
      %20 = vector.broadcast %c0_i32_15 : i32 to vector<1x352xi32>
      %21 = arith.cmpi ne, %19, %20 : vector<1x352xi32>
      %c0_i32_16 = arith.constant 0 : i32
      %22 = vector.broadcast %c0_i32_16 : i32 to vector<1x352xi32>
      %23 = arith.cmpi slt, %19, %22 : vector<1x352xi32>
      %c0_i32_17 = arith.constant 0 : i32
      %24 = arith.cmpi slt, %17, %c0_i32_17 : i32
      %25 = vector.broadcast %24 : i1 to vector<1x352xi1>
      %26 = vector.broadcast %25 : vector<1x352xi1> to vector<1x352xi1>
      %27 = arith.xori %23, %26 : vector<1x352xi1>
      %28 = arith.andi %27, %21 : vector<1x352xi1>
      %29 = vector.broadcast %17 : i32 to vector<1x352xi32>
      %30 = arith.addi %19, %29 : vector<1x352xi32>
      %31 = arith.select %28, %30, %19 : vector<1x352xi1>, vector<1x352xi32>
      %c0_18 = arith.constant 0 : index
      %c0_19 = arith.constant 0 : index
      %32 = vector.load %arg5[%c0_18, %c0_19] : memref<1x256xf32, #tpu.memory_space<vmem>>, vector<1x256xf32>
      %cst_20 = arith.constant 2.500000e-01 : f32
      %33 = vector.broadcast %cst_20 : f32 to vector<1x256xf32>
      %34 = arith.mulf %32, %33 : vector<1x256xf32>
      %c0_21 = arith.constant 0 : index
      %c51 = arith.constant 51 : index
      %35 = vector.load %arg7[%c0_21, %c51] : memref<2x358xf32, #tpu.memory_space<vmem>>, vector<1x256xf32>
      tpu.vector_store %arg7[%c0_21, %c51], %34 {strides = array<i32>} : memref<2x358xf32, #tpu.memory_space<vmem>>, vector<1x256xf32>,
      %c0_22 = arith.constant 0 : index
      %c0_23 = arith.constant 0 : index
      %36 = vector.load %arg6[%c0_22, %c0_23] : memref<1x256xf32, #tpu.memory_space<vmem>>, vector<1x256xf32>
      %c1 = arith.constant 1 : index
      %c51_24 = arith.constant 51 : index
      %37 = vector.load %arg7[%c1, %c51_24] : memref<2x358xf32, #tpu.memory_space<vmem>>, vector<1x256xf32>
      tpu.vector_store %arg7[%c1, %c51_24], %36 {strides = array<i32>} : memref<2x358xf32, #tpu.memory_space<vmem>>, vector<1x256xf32>,
      %cst_25 = arith.constant 0.000000e+00 : f32
      %38 = vector.broadcast %cst_25 : f32 to vector<1x256xf32>
      %cst_26 = arith.constant 0.000000e+00 : f32
      %39 = vector.broadcast %cst_26 : f32 to vector<1x256xf32>
      %c3_i32 = arith.constant 3 : i32
      %40 = vector.broadcast %c3_i32 : i32 to vector<1x352xi32>
      %41 = arith.cmpi sge, %31, %40 : vector<1x352xi32>
      %c19_i32 = arith.constant 19 : i32
      %42 = vector.broadcast %c19_i32 : i32 to vector<1x352xi32>
      %43 = arith.cmpi slt, %31, %42 : vector<1x352xi32>
      %44 = arith.andi %41, %43 : vector<1x352xi1>
      %c0_27 = arith.constant 0 : index
      %c0_28 = arith.constant 0 : index
      %45 = vector.load %arg7[%c0_27, %c0_28] : memref<2x358xf32, #tpu.memory_space<vmem>>, vector<2x352xf32>
      %cst_29 = arith.constant 0.000000e+00 : f32
      %46 = vector.shape_cast %44 : vector<1x352xi1> to vector<1x352xi1>
      %47 = vector.broadcast %46 : vector<1x352xi1> to vector<2x352xi1>
      %48 = vector.broadcast %cst_29 : f32 to vector<2x352xf32>
      %49 = arith.select %47, %45, %48 : vector<2x352xi1>, vector<2x352xf32>
      %c0_30 = arith.constant 0 : index
      %c0_31 = arith.constant 0 : index
      %50 = vector.load %arg8[%c0_30, %c0_31] : memref<2x352xf32, #tpu.memory_space<vmem>>, vector<2x352xf32>
      tpu.vector_store %arg8[%c0_30, %c0_31], %49 {strides = array<i32>} : memref<2x352xf32, #tpu.memory_space<vmem>>, vector<2x352xf32>,
      %c0_32 = arith.constant 0 : index
      %51 = memref.load %arg3[%c0_32] : memref<98xf32, #tpu.memory_space<smem>>
      %c0_33 = arith.constant 0 : index
      %c0_34 = arith.constant 0 : index
      %52 = vector.load %arg8[%c0_33, %c0_34] : memref<2x352xf32, #tpu.memory_space<vmem>>, vector<1x256xf32>
      %53 = vector.broadcast %51 : f32 to vector<1x256xf32>
      %54 = arith.mulf %53, %52 : vector<1x256xf32>
      %55 = arith.addf %38, %54 : vector<1x256xf32>
      %c7 = arith.constant 7 : index
      %56 = memref.load %arg3[%c7] : memref<98xf32, #tpu.memory_space<smem>>
      %c0_35 = arith.constant 0 : index
      %c16 = arith.constant 16 : index
      %57 = vector.load %arg8[%c0_35, %c16] : memref<2x352xf32, #tpu.memory_space<vmem>>, vector<1x256xf32>
      %58 = vector.broadcast %56 : f32 to vector<1x256xf32>
      %59 = arith.mulf %58, %57 : vector<1x256xf32>
      %60 = arith.addf %39, %59 : vector<1x256xf32>
      %c14 = arith.constant 14 : index
      %61 = memref.load %arg3[%c14] : memref<98xf32, #tpu.memory_space<smem>>
      %c0_36 = arith.constant 0 : index
      %c32 = arith.constant 32 : index
      %62 = vector.load %arg8[%c0_36, %c32] : memref<2x352xf32, #tpu.memory_space<vmem>>, vector<1x256xf32>
      %63 = vector.broadcast %61 : f32 to vector<1x256xf32>
      %64 = arith.mulf %63, %62 : vector<1x256xf32>
      %65 = arith.addf %55, %64 : vector<1x256xf32>
      %c21 = arith.constant 21 : index
      %66 = memref.load %arg3[%c21] : memref<98xf32, #tpu.memory_space<smem>>
      %c0_37 = arith.constant 0 : index
      %c48 = arith.constant 48 : index
      %67 = vector.load %arg8[%c0_37, %c48] : memref<2x352xf32, #tpu.memory_space<vmem>>, vector<1x256xf32>
      %68 = vector.broadcast %66 : f32 to vector<1x256xf32>
      %69 = arith.mulf %68, %67 : vector<1x256xf32>
      %70 = arith.addf %60, %69 : vector<1x256xf32>
      %c28 = arith.constant 28 : index
      %71 = memref.load %arg3[%c28] : memref<98xf32, #tpu.memory_space<smem>>
      %c0_38 = arith.constant 0 : index
      %c64 = arith.constant 64 : index
      %72 = vector.load %arg8[%c0_38, %c64] : memref<2x352xf32, #tpu.memory_space<vmem>>, vector<1x256xf32>
      %73 = vector.broadcast %71 : f32 to vector<1x256xf32>
      %74 = arith.mulf %73, %72 : vector<1x256xf32>
      %75 = arith.addf %65, %74 : vector<1x256xf32>
      %c35 = arith.constant 35 : index
      %76 = memref.load %arg3[%c35] : memref<98xf32, #tpu.memory_space<smem>>
      %c0_39 = arith.constant 0 : index
      %c80 = arith.constant 80 : index
      %77 = vector.load %arg8[%c0_39, %c80] : memref<2x352xf32, #tpu.memory_space<vmem>>, vector<1x256xf32>
      %78 = vector.broadcast %76 : f32 to vector<1x256xf32>
      %79 = arith.mulf %78, %77 : vector<1x256xf32>
      %80 = arith.addf %70, %79 : vector<1x256xf32>
      %c42 = arith.constant 42 : index
      %81 = memref.load %arg3[%c42] : memref<98xf32, #tpu.memory_space<smem>>
      %c0_40 = arith.constant 0 : index
      %c96 = arith.constant 96 : index
      %82 = vector.load %arg8[%c0_40, %c96] : memref<2x352xf32, #tpu.memory_space<vmem>>, vector<1x256xf32>
      %83 = vector.broadcast %81 : f32 to vector<1x256xf32>
      %84 = arith.mulf %83, %82 : vector<1x256xf32>
      %85 = arith.addf %75, %84 : vector<1x256xf32>
      %c49 = arith.constant 49 : index
      %86 = memref.load %arg3[%c49] : memref<98xf32, #tpu.memory_space<smem>>
      %c1_41 = arith.constant 1 : index
      %c0_42 = arith.constant 0 : index
      %87 = vector.load %arg8[%c1_41, %c0_42] : memref<2x352xf32, #tpu.memory_space<vmem>>, vector<1x256xf32>
      %88 = vector.broadcast %86 : f32 to vector<1x256xf32>
      %89 = arith.mulf %88, %87 : vector<1x256xf32>
      %90 = arith.addf %80, %89 : vector<1x256xf32>
      %c56 = arith.constant 56 : index
      %91 = memref.load %arg3[%c56] : memref<98xf32, #tpu.memory_space<smem>>
      %c1_43 = arith.constant 1 : index
      %c16_44 = arith.constant 16 : index
      %92 = vector.load %arg8[%c1_43, %c16_44] : memref<2x352xf32, #tpu.memory_space<vmem>>, vector<1x256xf32>
      %93 = vector.broadcast %91 : f32 to vector<1x256xf32>
      %94 = arith.mulf %93, %92 : vector<1x256xf32>
      %95 = arith.addf %85, %94 : vector<1x256xf32>
      %c63 = arith.constant 63 : index
      %96 = memref.load %arg3[%c63] : memref<98xf32, #tpu.memory_space<smem>>
      %c1_45 = arith.constant 1 : index
      %c32_46 = arith.constant 32 : index
      %97 = vector.load %arg8[%c1_45, %c32_46] : memref<2x352xf32, #tpu.memory_space<vmem>>, vector<1x256xf32>
      %98 = vector.broadcast %96 : f32 to vector<1x256xf32>
      %99 = arith.mulf %98, %97 : vector<1x256xf32>
      %100 = arith.addf %90, %99 : vector<1x256xf32>
      %c70 = arith.constant 70 : index
      %101 = memref.load %arg3[%c70] : memref<98xf32, #tpu.memory_space<smem>>
      %c1_47 = arith.constant 1 : index
      %c48_48 = arith.constant 48 : index
      %102 = vector.load %arg8[%c1_47, %c48_48] : memref<2x352xf32, #tpu.memory_space<vmem>>, vector<1x256xf32>
      %103 = vector.broadcast %101 : f32 to vector<1x256xf32>
      %104 = arith.mulf %103, %102 : vector<1x256xf32>
      %105 = arith.addf %95, %104 : vector<1x256xf32>
      %c77 = arith.constant 77 : index
      %106 = memref.load %arg3[%c77] : memref<98xf32, #tpu.memory_space<smem>>
      %c1_49 = arith.constant 1 : index
      %c64_50 = arith.constant 64 : index
      %107 = vector.load %arg8[%c1_49, %c64_50] : memref<2x352xf32, #tpu.memory_space<vmem>>, vector<1x256xf32>
      %108 = vector.broadcast %106 : f32 to vector<1x256xf32>
      %109 = arith.mulf %108, %107 : vector<1x256xf32>
      %110 = arith.addf %100, %109 : vector<1x256xf32>
      %c84 = arith.constant 84 : index
      %111 = memref.load %arg3[%c84] : memref<98xf32, #tpu.memory_space<smem>>
      %c1_51 = arith.constant 1 : index
      %c80_52 = arith.constant 80 : index
      %112 = vector.load %arg8[%c1_51, %c80_52] : memref<2x352xf32, #tpu.memory_space<vmem>>, vector<1x256xf32>
      %113 = vector.broadcast %111 : f32 to vector<1x256xf32>
      %114 = arith.mulf %113, %112 : vector<1x256xf32>
      %115 = arith.addf %105, %114 : vector<1x256xf32>
      %c91 = arith.constant 91 : index
      %116 = memref.load %arg3[%c91] : memref<98xf32, #tpu.memory_space<smem>>
      %c1_53 = arith.constant 1 : index
      %c96_54 = arith.constant 96 : index
      %117 = vector.load %arg8[%c1_53, %c96_54] : memref<2x352xf32, #tpu.memory_space<vmem>>, vector<1x256xf32>
      %118 = vector.broadcast %116 : f32 to vector<1x256xf32>
      %119 = arith.mulf %118, %117 : vector<1x256xf32>
      %120 = arith.addf %110, %119 : vector<1x256xf32>
      %c2_i32 = arith.constant 2 : i32
      %121 = vector.broadcast %c2_i32 : i32 to vector<1x352xi32>
      %122 = arith.cmpi sge, %31, %121 : vector<1x352xi32>
      %c18_i32 = arith.constant 18 : i32
      %123 = vector.broadcast %c18_i32 : i32 to vector<1x352xi32>
      %124 = arith.cmpi slt, %31, %123 : vector<1x352xi32>
      %125 = arith.andi %122, %124 : vector<1x352xi1>
      %c0_55 = arith.constant 0 : index
      %c1_56 = arith.constant 1 : index
      %126 = vector.load %arg7[%c0_55, %c1_56] : memref<2x358xf32, #tpu.memory_space<vmem>>, vector<2x352xf32>
      %cst_57 = arith.constant 0.000000e+00 : f32
      %127 = vector.shape_cast %125 : vector<1x352xi1> to vector<1x352xi1>
      %128 = vector.broadcast %127 : vector<1x352xi1> to vector<2x352xi1>
      %129 = vector.broadcast %cst_57 : f32 to vector<2x352xf32>
      %130 = arith.select %128, %126, %129 : vector<2x352xi1>, vector<2x352xf32>
      %c0_58 = arith.constant 0 : index
      %c0_59 = arith.constant 0 : index
      %131 = vector.load %arg8[%c0_58, %c0_59] : memref<2x352xf32, #tpu.memory_space<vmem>>, vector<2x352xf32>
      tpu.vector_store %arg8[%c0_58, %c0_59], %130 {strides = array<i32>} : memref<2x352xf32, #tpu.memory_space<vmem>>, vector<2x352xf32>,
      %c1_60 = arith.constant 1 : index
      %132 = memref.load %arg3[%c1_60] : memref<98xf32, #tpu.memory_space<smem>>
      %c0_61 = arith.constant 0 : index
      %c0_62 = arith.constant 0 : index
      %133 = vector.load %arg8[%c0_61, %c0_62] : memref<2x352xf32, #tpu.memory_space<vmem>>, vector<1x256xf32>
      %134 = vector.broadcast %132 : f32 to vector<1x256xf32>
      %135 = arith.mulf %134, %133 : vector<1x256xf32>
      %136 = arith.addf %120, %135 : vector<1x256xf32>
      %c8 = arith.constant 8 : index
      %137 = memref.load %arg3[%c8] : memref<98xf32, #tpu.memory_space<smem>>
      %c0_63 = arith.constant 0 : index
      %c16_64 = arith.constant 16 : index
      %138 = vector.load %arg8[%c0_63, %c16_64] : memref<2x352xf32, #tpu.memory_space<vmem>>, vector<1x256xf32>
      %139 = vector.broadcast %137 : f32 to vector<1x256xf32>
      %140 = arith.mulf %139, %138 : vector<1x256xf32>
      %141 = arith.addf %115, %140 : vector<1x256xf32>
      %c15 = arith.constant 15 : index
      %142 = memref.load %arg3[%c15] : memref<98xf32, #tpu.memory_space<smem>>
      %c0_65 = arith.constant 0 : index
      %c32_66 = arith.constant 32 : index
      %143 = vector.load %arg8[%c0_65, %c32_66] : memref<2x352xf32, #tpu.memory_space<vmem>>, vector<1x256xf32>
      %144 = vector.broadcast %142 : f32 to vector<1x256xf32>
      %145 = arith.mulf %144, %143 : vector<1x256xf32>
      %146 = arith.addf %136, %145 : vector<1x256xf32>
      %c22 = arith.constant 22 : index
      %147 = memref.load %arg3[%c22] : memref<98xf32, #tpu.memory_space<smem>>
      %c0_67 = arith.constant 0 : index
      %c48_68 = arith.constant 48 : index
      %148 = vector.load %arg8[%c0_67, %c48_68] : memref<2x352xf32, #tpu.memory_space<vmem>>, vector<1x256xf32>
      %149 = vector.broadcast %147 : f32 to vector<1x256xf32>
      %150 = arith.mulf %149, %148 : vector<1x256xf32>
      %151 = arith.addf %141, %150 : vector<1x256xf32>
      %c29 = arith.constant 29 : index
      %152 = memref.load %arg3[%c29] : memref<98xf32, #tpu.memory_space<smem>>
      %c0_69 = arith.constant 0 : index
      %c64_70 = arith.constant 64 : index
      %153 = vector.load %arg8[%c0_69, %c64_70] : memref<2x352xf32, #tpu.memory_space<vmem>>, vector<1x256xf32>
      %154 = vector.broadcast %152 : f32 to vector<1x256xf32>
      %155 = arith.mulf %154, %153 : vector<1x256xf32>
      %156 = arith.addf %146, %155 : vector<1x256xf32>
      %c36 = arith.constant 36 : index
      %157 = memref.load %arg3[%c36] : memref<98xf32, #tpu.memory_space<smem>>
      %c0_71 = arith.constant 0 : index
      %c80_72 = arith.constant 80 : index
      %158 = vector.load %arg8[%c0_71, %c80_72] : memref<2x352xf32, #tpu.memory_space<vmem>>, vector<1x256xf32>
      %159 = vector.broadcast %157 : f32 to vector<1x256xf32>
      %160 = arith.mulf %159, %158 : vector<1x256xf32>
      %161 = arith.addf %151, %160 : vector<1x256xf32>
      %c43 = arith.constant 43 : index
      %162 = memref.load %arg3[%c43] : memref<98xf32, #tpu.memory_space<smem>>
      %c0_73 = arith.constant 0 : index
      %c96_74 = arith.constant 96 : index
      %163 = vector.load %arg8[%c0_73, %c96_74] : memref<2x352xf32, #tpu.memory_space<vmem>>, vector<1x256xf32>
      %164 = vector.broadcast %162 : f32 to vector<1x256xf32>
      %165 = arith.mulf %164, %163 : vector<1x256xf32>
      %166 = arith.addf %156, %165 : vector<1x256xf32>
      %c50 = arith.constant 50 : index
      %167 = memref.load %arg3[%c50] : memref<98xf32, #tpu.memory_space<smem>>
      %c1_75 = arith.constant 1 : index
      %c0_76 = arith.constant 0 : index
      %168 = vector.load %arg8[%c1_75, %c0_76] : memref<2x352xf32, #tpu.memory_space<vmem>>, vector<1x256xf32>
      %169 = vector.broadcast %167 : f32 to vector<1x256xf32>
      %170 = arith.mulf %169, %168 : vector<1x256xf32>
      %171 = arith.addf %161, %170 : vector<1x256xf32>
      %c57 = arith.constant 57 : index
      %172 = memref.load %arg3[%c57] : memref<98xf32, #tpu.memory_space<smem>>
      %c1_77 = arith.constant 1 : index
      %c16_78 = arith.constant 16 : index
      %173 = vector.load %arg8[%c1_77, %c16_78] : memref<2x352xf32, #tpu.memory_space<vmem>>, vector<1x256xf32>
      %174 = vector.broadcast %172 : f32 to vector<1x256xf32>
      %175 = arith.mulf %174, %173 : vector<1x256xf32>
      %176 = arith.addf %166, %175 : vector<1x256xf32>
      %c64_79 = arith.constant 64 : index
      %177 = memref.load %arg3[%c64_79] : memref<98xf32, #tpu.memory_space<smem>>
      %c1_80 = arith.constant 1 : index
      %c32_81 = arith.constant 32 : index
      %178 = vector.load %arg8[%c1_80, %c32_81] : memref<2x352xf32, #tpu.memory_space<vmem>>, vector<1x256xf32>
      %179 = vector.broadcast %177 : f32 to vector<1x256xf32>
      %180 = arith.mulf %179, %178 : vector<1x256xf32>
      %181 = arith.addf %171, %180 : vector<1x256xf32>
      %c71 = arith.constant 71 : index
      %182 = memref.load %arg3[%c71] : memref<98xf32, #tpu.memory_space<smem>>
      %c1_82 = arith.constant 1 : index
      %c48_83 = arith.constant 48 : index
      %183 = vector.load %arg8[%c1_82, %c48_83] : memref<2x352xf32, #tpu.memory_space<vmem>>, vector<1x256xf32>
      %184 = vector.broadcast %182 : f32 to vector<1x256xf32>
      %185 = arith.mulf %184, %183 : vector<1x256xf32>
      %186 = arith.addf %176, %185 : vector<1x256xf32>
      %c78 = arith.constant 78 : index
      %187 = memref.load %arg3[%c78] : memref<98xf32, #tpu.memory_space<smem>>
      %c1_84 = arith.constant 1 : index
      %c64_85 = arith.constant 64 : index
      %188 = vector.load %arg8[%c1_84, %c64_85] : memref<2x352xf32, #tpu.memory_space<vmem>>, vector<1x256xf32>
      %189 = vector.broadcast %187 : f32 to vector<1x256xf32>
      %190 = arith.mulf %189, %188 : vector<1x256xf32>
      %191 = arith.addf %181, %190 : vector<1x256xf32>
      %c85 = arith.constant 85 : index
      %192 = memref.load %arg3[%c85] : memref<98xf32, #tpu.memory_space<smem>>
      %c1_86 = arith.constant 1 : index
      %c80_87 = arith.constant 80 : index
      %193 = vector.load %arg8[%c1_86, %c80_87] : memref<2x352xf32, #tpu.memory_space<vmem>>, vector<1x256xf32>
      %194 = vector.broadcast %192 : f32 to vector<1x256xf32>
      %195 = arith.mulf %194, %193 : vector<1x256xf32>
      %196 = arith.addf %186, %195 : vector<1x256xf32>
      %c92 = arith.constant 92 : index
      %197 = memref.load %arg3[%c92] : memref<98xf32, #tpu.memory_space<smem>>
      %c1_88 = arith.constant 1 : index
      %c96_89 = arith.constant 96 : index
      %198 = vector.load %arg8[%c1_88, %c96_89] : memref<2x352xf32, #tpu.memory_space<vmem>>, vector<1x256xf32>
      %199 = vector.broadcast %197 : f32 to vector<1x256xf32>
      %200 = arith.mulf %199, %198 : vector<1x256xf32>
      %201 = arith.addf %191, %200 : vector<1x256xf32>
      %c1_i32_90 = arith.constant 1 : i32
      %202 = vector.broadcast %c1_i32_90 : i32 to vector<1x352xi32>
      %203 = arith.cmpi sge, %31, %202 : vector<1x352xi32>
      %c17_i32 = arith.constant 17 : i32
      %204 = vector.broadcast %c17_i32 : i32 to vector<1x352xi32>
      %205 = arith.cmpi slt, %31, %204 : vector<1x352xi32>
      %206 = arith.andi %203, %205 : vector<1x352xi1>
      %c0_91 = arith.constant 0 : index
      %c2 = arith.constant 2 : index
      %207 = vector.load %arg7[%c0_91, %c2] : memref<2x358xf32, #tpu.memory_space<vmem>>, vector<2x352xf32>
      %cst_92 = arith.constant 0.000000e+00 : f32
      %208 = vector.shape_cast %206 : vector<1x352xi1> to vector<1x352xi1>
      %209 = vector.broadcast %208 : vector<1x352xi1> to vector<2x352xi1>
      %210 = vector.broadcast %cst_92 : f32 to vector<2x352xf32>
      %211 = arith.select %209, %207, %210 : vector<2x352xi1>, vector<2x352xf32>
      %c0_93 = arith.constant 0 : index
      %c0_94 = arith.constant 0 : index
      %212 = vector.load %arg8[%c0_93, %c0_94] : memref<2x352xf32, #tpu.memory_space<vmem>>, vector<2x352xf32>
      tpu.vector_store %arg8[%c0_93, %c0_94], %211 {strides = array<i32>} : memref<2x352xf32, #tpu.memory_space<vmem>>, vector<2x352xf32>,
      %c2_95 = arith.constant 2 : index
      %213 = memref.load %arg3[%c2_95] : memref<98xf32, #tpu.memory_space<smem>>
      %c0_96 = arith.constant 0 : index
      %c0_97 = arith.constant 0 : index
      %214 = vector.load %arg8[%c0_96, %c0_97] : memref<2x352xf32, #tpu.memory_space<vmem>>, vector<1x256xf32>
      %215 = vector.broadcast %213 : f32 to vector<1x256xf32>
      %216 = arith.mulf %215, %214 : vector<1x256xf32>
      %217 = arith.addf %201, %216 : vector<1x256xf32>
      %c9 = arith.constant 9 : index
      %218 = memref.load %arg3[%c9] : memref<98xf32, #tpu.memory_space<smem>>
      %c0_98 = arith.constant 0 : index
      %c16_99 = arith.constant 16 : index
      %219 = vector.load %arg8[%c0_98, %c16_99] : memref<2x352xf32, #tpu.memory_space<vmem>>, vector<1x256xf32>
      %220 = vector.broadcast %218 : f32 to vector<1x256xf32>
      %221 = arith.mulf %220, %219 : vector<1x256xf32>
      %222 = arith.addf %196, %221 : vector<1x256xf32>
      %c16_100 = arith.constant 16 : index
      %223 = memref.load %arg3[%c16_100] : memref<98xf32, #tpu.memory_space<smem>>
      %c0_101 = arith.constant 0 : index
      %c32_102 = arith.constant 32 : index
      %224 = vector.load %arg8[%c0_101, %c32_102] : memref<2x352xf32, #tpu.memory_space<vmem>>, vector<1x256xf32>
      %225 = vector.broadcast %223 : f32 to vector<1x256xf32>
      %226 = arith.mulf %225, %224 : vector<1x256xf32>
      %227 = arith.addf %217, %226 : vector<1x256xf32>
      %c23 = arith.constant 23 : index
      %228 = memref.load %arg3[%c23] : memref<98xf32, #tpu.memory_space<smem>>
      %c0_103 = arith.constant 0 : index
      %c48_104 = arith.constant 48 : index
      %229 = vector.load %arg8[%c0_103, %c48_104] : memref<2x352xf32, #tpu.memory_space<vmem>>, vector<1x256xf32>
      %230 = vector.broadcast %228 : f32 to vector<1x256xf32>
      %231 = arith.mulf %230, %229 : vector<1x256xf32>
      %232 = arith.addf %222, %231 : vector<1x256xf32>
      %c30 = arith.constant 30 : index
      %233 = memref.load %arg3[%c30] : memref<98xf32, #tpu.memory_space<smem>>
      %c0_105 = arith.constant 0 : index
      %c64_106 = arith.constant 64 : index
      %234 = vector.load %arg8[%c0_105, %c64_106] : memref<2x352xf32, #tpu.memory_space<vmem>>, vector<1x256xf32>
      %235 = vector.broadcast %233 : f32 to vector<1x256xf32>
      %236 = arith.mulf %235, %234 : vector<1x256xf32>
      %237 = arith.addf %227, %236 : vector<1x256xf32>
      %c37 = arith.constant 37 : index
      %238 = memref.load %arg3[%c37] : memref<98xf32, #tpu.memory_space<smem>>
      %c0_107 = arith.constant 0 : index
      %c80_108 = arith.constant 80 : index
      %239 = vector.load %arg8[%c0_107, %c80_108] : memref<2x352xf32, #tpu.memory_space<vmem>>, vector<1x256xf32>
      %240 = vector.broadcast %238 : f32 to vector<1x256xf32>
      %241 = arith.mulf %240, %239 : vector<1x256xf32>
      %242 = arith.addf %232, %241 : vector<1x256xf32>
      %c44 = arith.constant 44 : index
      %243 = memref.load %arg3[%c44] : memref<98xf32, #tpu.memory_space<smem>>
      %c0_109 = arith.constant 0 : index
      %c96_110 = arith.constant 96 : index
      %244 = vector.load %arg8[%c0_109, %c96_110] : memref<2x352xf32, #tpu.memory_space<vmem>>, vector<1x256xf32>
      %245 = vector.broadcast %243 : f32 to vector<1x256xf32>
      %246 = arith.mulf %245, %244 : vector<1x256xf32>
      %247 = arith.addf %237, %246 : vector<1x256xf32>
      %c51_111 = arith.constant 51 : index
      %248 = memref.load %arg3[%c51_111] : memref<98xf32, #tpu.memory_space<smem>>
      %c1_112 = arith.constant 1 : index
      %c0_113 = arith.constant 0 : index
      %249 = vector.load %arg8[%c1_112, %c0_113] : memref<2x352xf32, #tpu.memory_space<vmem>>, vector<1x256xf32>
      %250 = vector.broadcast %248 : f32 to vector<1x256xf32>
      %251 = arith.mulf %250, %249 : vector<1x256xf32>
      %252 = arith.addf %242, %251 : vector<1x256xf32>
      %c58 = arith.constant 58 : index
      %253 = memref.load %arg3[%c58] : memref<98xf32, #tpu.memory_space<smem>>
      %c1_114 = arith.constant 1 : index
      %c16_115 = arith.constant 16 : index
      %254 = vector.load %arg8[%c1_114, %c16_115] : memref<2x352xf32, #tpu.memory_space<vmem>>, vector<1x256xf32>
      %255 = vector.broadcast %253 : f32 to vector<1x256xf32>
      %256 = arith.mulf %255, %254 : vector<1x256xf32>
      %257 = arith.addf %247, %256 : vector<1x256xf32>
      %c65 = arith.constant 65 : index
      %258 = memref.load %arg3[%c65] : memref<98xf32, #tpu.memory_space<smem>>
      %c1_116 = arith.constant 1 : index
      %c32_117 = arith.constant 32 : index
      %259 = vector.load %arg8[%c1_116, %c32_117] : memref<2x352xf32, #tpu.memory_space<vmem>>, vector<1x256xf32>
      %260 = vector.broadcast %258 : f32 to vector<1x256xf32>
      %261 = arith.mulf %260, %259 : vector<1x256xf32>
      %262 = arith.addf %252, %261 : vector<1x256xf32>
      %c72 = arith.constant 72 : index
      %263 = memref.load %arg3[%c72] : memref<98xf32, #tpu.memory_space<smem>>
      %c1_118 = arith.constant 1 : index
      %c48_119 = arith.constant 48 : index
      %264 = vector.load %arg8[%c1_118, %c48_119] : memref<2x352xf32, #tpu.memory_space<vmem>>, vector<1x256xf32>
      %265 = vector.broadcast %263 : f32 to vector<1x256xf32>
      %266 = arith.mulf %265, %264 : vector<1x256xf32>
      %267 = arith.addf %257, %266 : vector<1x256xf32>
      %c79 = arith.constant 79 : index
      %268 = memref.load %arg3[%c79] : memref<98xf32, #tpu.memory_space<smem>>
      %c1_120 = arith.constant 1 : index
      %c64_121 = arith.constant 64 : index
      %269 = vector.load %arg8[%c1_120, %c64_121] : memref<2x352xf32, #tpu.memory_space<vmem>>, vector<1x256xf32>
      %270 = vector.broadcast %268 : f32 to vector<1x256xf32>
      %271 = arith.mulf %270, %269 : vector<1x256xf32>
      %272 = arith.addf %262, %271 : vector<1x256xf32>
      %c86 = arith.constant 86 : index
      %273 = memref.load %arg3[%c86] : memref<98xf32, #tpu.memory_space<smem>>
      %c1_122 = arith.constant 1 : index
      %c80_123 = arith.constant 80 : index
      %274 = vector.load %arg8[%c1_122, %c80_123] : memref<2x352xf32, #tpu.memory_space<vmem>>, vector<1x256xf32>
      %275 = vector.broadcast %273 : f32 to vector<1x256xf32>
      %276 = arith.mulf %275, %274 : vector<1x256xf32>
      %277 = arith.addf %267, %276 : vector<1x256xf32>
      %c93 = arith.constant 93 : index
      %278 = memref.load %arg3[%c93] : memref<98xf32, #tpu.memory_space<smem>>
      %c1_124 = arith.constant 1 : index
      %c96_125 = arith.constant 96 : index
      %279 = vector.load %arg8[%c1_124, %c96_125] : memref<2x352xf32, #tpu.memory_space<vmem>>, vector<1x256xf32>
      %280 = vector.broadcast %278 : f32 to vector<1x256xf32>
      %281 = arith.mulf %280, %279 : vector<1x256xf32>
      %282 = arith.addf %272, %281 : vector<1x256xf32>
      %c0_i32_126 = arith.constant 0 : i32
      %283 = vector.broadcast %c0_i32_126 : i32 to vector<1x352xi32>
      %284 = arith.cmpi sge, %31, %283 : vector<1x352xi32>
      %c16_i32_127 = arith.constant 16 : i32
      %285 = vector.broadcast %c16_i32_127 : i32 to vector<1x352xi32>
      %286 = arith.cmpi slt, %31, %285 : vector<1x352xi32>
      %287 = arith.andi %284, %286 : vector<1x352xi1>
      %c0_128 = arith.constant 0 : index
      %c3 = arith.constant 3 : index
      %288 = vector.load %arg7[%c0_128, %c3] : memref<2x358xf32, #tpu.memory_space<vmem>>, vector<2x352xf32>
      %cst_129 = arith.constant 0.000000e+00 : f32
      %289 = vector.shape_cast %287 : vector<1x352xi1> to vector<1x352xi1>
      %290 = vector.broadcast %289 : vector<1x352xi1> to vector<2x352xi1>
      %291 = vector.broadcast %cst_129 : f32 to vector<2x352xf32>
      %292 = arith.select %290, %288, %291 : vector<2x352xi1>, vector<2x352xf32>
      %c0_130 = arith.constant 0 : index
      %c0_131 = arith.constant 0 : index
      %293 = vector.load %arg8[%c0_130, %c0_131] : memref<2x352xf32, #tpu.memory_space<vmem>>, vector<2x352xf32>
      tpu.vector_store %arg8[%c0_130, %c0_131], %292 {strides = array<i32>} : memref<2x352xf32, #tpu.memory_space<vmem>>, vector<2x352xf32>,
      %c3_132 = arith.constant 3 : index
      %294 = memref.load %arg3[%c3_132] : memref<98xf32, #tpu.memory_space<smem>>
      %c0_133 = arith.constant 0 : index
      %c0_134 = arith.constant 0 : index
      %295 = vector.load %arg8[%c0_133, %c0_134] : memref<2x352xf32, #tpu.memory_space<vmem>>, vector<1x256xf32>
      %296 = vector.broadcast %294 : f32 to vector<1x256xf32>
      %297 = arith.mulf %296, %295 : vector<1x256xf32>
      %298 = arith.addf %282, %297 : vector<1x256xf32>
      %c10 = arith.constant 10 : index
      %299 = memref.load %arg3[%c10] : memref<98xf32, #tpu.memory_space<smem>>
      %c0_135 = arith.constant 0 : index
      %c16_136 = arith.constant 16 : index
      %300 = vector.load %arg8[%c0_135, %c16_136] : memref<2x352xf32, #tpu.memory_space<vmem>>, vector<1x256xf32>
      %301 = vector.broadcast %299 : f32 to vector<1x256xf32>
      %302 = arith.mulf %301, %300 : vector<1x256xf32>
      %303 = arith.addf %277, %302 : vector<1x256xf32>
      %c17 = arith.constant 17 : index
      %304 = memref.load %arg3[%c17] : memref<98xf32, #tpu.memory_space<smem>>
      %c0_137 = arith.constant 0 : index
      %c32_138 = arith.constant 32 : index
      %305 = vector.load %arg8[%c0_137, %c32_138] : memref<2x352xf32, #tpu.memory_space<vmem>>, vector<1x256xf32>
      %306 = vector.broadcast %304 : f32 to vector<1x256xf32>
      %307 = arith.mulf %306, %305 : vector<1x256xf32>
      %308 = arith.addf %298, %307 : vector<1x256xf32>
      %c24 = arith.constant 24 : index
      %309 = memref.load %arg3[%c24] : memref<98xf32, #tpu.memory_space<smem>>
      %c0_139 = arith.constant 0 : index
      %c48_140 = arith.constant 48 : index
      %310 = vector.load %arg8[%c0_139, %c48_140] : memref<2x352xf32, #tpu.memory_space<vmem>>, vector<1x256xf32>
      %311 = vector.broadcast %309 : f32 to vector<1x256xf32>
      %312 = arith.mulf %311, %310 : vector<1x256xf32>
      %313 = arith.addf %303, %312 : vector<1x256xf32>
      %c31 = arith.constant 31 : index
      %314 = memref.load %arg3[%c31] : memref<98xf32, #tpu.memory_space<smem>>
      %c0_141 = arith.constant 0 : index
      %c64_142 = arith.constant 64 : index
      %315 = vector.load %arg8[%c0_141, %c64_142] : memref<2x352xf32, #tpu.memory_space<vmem>>, vector<1x256xf32>
      %316 = vector.broadcast %314 : f32 to vector<1x256xf32>
      %317 = arith.mulf %316, %315 : vector<1x256xf32>
      %318 = arith.addf %308, %317 : vector<1x256xf32>
      %c38 = arith.constant 38 : index
      %319 = memref.load %arg3[%c38] : memref<98xf32, #tpu.memory_space<smem>>
      %c0_143 = arith.constant 0 : index
      %c80_144 = arith.constant 80 : index
      %320 = vector.load %arg8[%c0_143, %c80_144] : memref<2x352xf32, #tpu.memory_space<vmem>>, vector<1x256xf32>
      %321 = vector.broadcast %319 : f32 to vector<1x256xf32>
      %322 = arith.mulf %321, %320 : vector<1x256xf32>
      %323 = arith.addf %313, %322 : vector<1x256xf32>
      %c45 = arith.constant 45 : index
      %324 = memref.load %arg3[%c45] : memref<98xf32, #tpu.memory_space<smem>>
      %c0_145 = arith.constant 0 : index
      %c96_146 = arith.constant 96 : index
      %325 = vector.load %arg8[%c0_145, %c96_146] : memref<2x352xf32, #tpu.memory_space<vmem>>, vector<1x256xf32>
      %326 = vector.broadcast %324 : f32 to vector<1x256xf32>
      %327 = arith.mulf %326, %325 : vector<1x256xf32>
      %328 = arith.addf %318, %327 : vector<1x256xf32>
      %c52 = arith.constant 52 : index
      %329 = memref.load %arg3[%c52] : memref<98xf32, #tpu.memory_space<smem>>
      %c1_147 = arith.constant 1 : index
      %c0_148 = arith.constant 0 : index
      %330 = vector.load %arg8[%c1_147, %c0_148] : memref<2x352xf32, #tpu.memory_space<vmem>>, vector<1x256xf32>
      %331 = vector.broadcast %329 : f32 to vector<1x256xf32>
      %332 = arith.mulf %331, %330 : vector<1x256xf32>
      %333 = arith.addf %323, %332 : vector<1x256xf32>
      %c59 = arith.constant 59 : index
      %334 = memref.load %arg3[%c59] : memref<98xf32, #tpu.memory_space<smem>>
      %c1_149 = arith.constant 1 : index
      %c16_150 = arith.constant 16 : index
      %335 = vector.load %arg8[%c1_149, %c16_150] : memref<2x352xf32, #tpu.memory_space<vmem>>, vector<1x256xf32>
      %336 = vector.broadcast %334 : f32 to vector<1x256xf32>
      %337 = arith.mulf %336, %335 : vector<1x256xf32>
      %338 = arith.addf %328, %337 : vector<1x256xf32>
      %c66 = arith.constant 66 : index
      %339 = memref.load %arg3[%c66] : memref<98xf32, #tpu.memory_space<smem>>
      %c1_151 = arith.constant 1 : index
      %c32_152 = arith.constant 32 : index
      %340 = vector.load %arg8[%c1_151, %c32_152] : memref<2x352xf32, #tpu.memory_space<vmem>>, vector<1x256xf32>
      %341 = vector.broadcast %339 : f32 to vector<1x256xf32>
      %342 = arith.mulf %341, %340 : vector<1x256xf32>
      %343 = arith.addf %333, %342 : vector<1x256xf32>
      %c73 = arith.constant 73 : index
      %344 = memref.load %arg3[%c73] : memref<98xf32, #tpu.memory_space<smem>>
      %c1_153 = arith.constant 1 : index
      %c48_154 = arith.constant 48 : index
      %345 = vector.load %arg8[%c1_153, %c48_154] : memref<2x352xf32, #tpu.memory_space<vmem>>, vector<1x256xf32>
      %346 = vector.broadcast %344 : f32 to vector<1x256xf32>
      %347 = arith.mulf %346, %345 : vector<1x256xf32>
      %348 = arith.addf %338, %347 : vector<1x256xf32>
      %c80_155 = arith.constant 80 : index
      %349 = memref.load %arg3[%c80_155] : memref<98xf32, #tpu.memory_space<smem>>
      %c1_156 = arith.constant 1 : index
      %c64_157 = arith.constant 64 : index
      %350 = vector.load %arg8[%c1_156, %c64_157] : memref<2x352xf32, #tpu.memory_space<vmem>>, vector<1x256xf32>
      %351 = vector.broadcast %349 : f32 to vector<1x256xf32>
      %352 = arith.mulf %351, %350 : vector<1x256xf32>
      %353 = arith.addf %343, %352 : vector<1x256xf32>
      %c87 = arith.constant 87 : index
      %354 = memref.load %arg3[%c87] : memref<98xf32, #tpu.memory_space<smem>>
      %c1_158 = arith.constant 1 : index
      %c80_159 = arith.constant 80 : index
      %355 = vector.load %arg8[%c1_158, %c80_159] : memref<2x352xf32, #tpu.memory_space<vmem>>, vector<1x256xf32>
      %356 = vector.broadcast %354 : f32 to vector<1x256xf32>
      %357 = arith.mulf %356, %355 : vector<1x256xf32>
      %358 = arith.addf %348, %357 : vector<1x256xf32>
      %c94 = arith.constant 94 : index
      %359 = memref.load %arg3[%c94] : memref<98xf32, #tpu.memory_space<smem>>
      %c1_160 = arith.constant 1 : index
      %c96_161 = arith.constant 96 : index
      %360 = vector.load %arg8[%c1_160, %c96_161] : memref<2x352xf32, #tpu.memory_space<vmem>>, vector<1x256xf32>
      %361 = vector.broadcast %359 : f32 to vector<1x256xf32>
      %362 = arith.mulf %361, %360 : vector<1x256xf32>
      %363 = arith.addf %353, %362 : vector<1x256xf32>
      %c-1_i32 = arith.constant -1 : i32
      %364 = vector.broadcast %c-1_i32 : i32 to vector<1x352xi32>
      %365 = arith.cmpi sge, %31, %364 : vector<1x352xi32>
      %c15_i32 = arith.constant 15 : i32
      %366 = vector.broadcast %c15_i32 : i32 to vector<1x352xi32>
      %367 = arith.cmpi slt, %31, %366 : vector<1x352xi32>
      %368 = arith.andi %365, %367 : vector<1x352xi1>
      %c0_162 = arith.constant 0 : index
      %c4 = arith.constant 4 : index
      %369 = vector.load %arg7[%c0_162, %c4] : memref<2x358xf32, #tpu.memory_space<vmem>>, vector<2x352xf32>
      %cst_163 = arith.constant 0.000000e+00 : f32
      %370 = vector.shape_cast %368 : vector<1x352xi1> to vector<1x352xi1>
      %371 = vector.broadcast %370 : vector<1x352xi1> to vector<2x352xi1>
      %372 = vector.broadcast %cst_163 : f32 to vector<2x352xf32>
      %373 = arith.select %371, %369, %372 : vector<2x352xi1>, vector<2x352xf32>
      %c0_164 = arith.constant 0 : index
      %c0_165 = arith.constant 0 : index
      %374 = vector.load %arg8[%c0_164, %c0_165] : memref<2x352xf32, #tpu.memory_space<vmem>>, vector<2x352xf32>
      tpu.vector_store %arg8[%c0_164, %c0_165], %373 {strides = array<i32>} : memref<2x352xf32, #tpu.memory_space<vmem>>, vector<2x352xf32>,
      %c4_166 = arith.constant 4 : index
      %375 = memref.load %arg3[%c4_166] : memref<98xf32, #tpu.memory_space<smem>>
      %c0_167 = arith.constant 0 : index
      %c0_168 = arith.constant 0 : index
      %376 = vector.load %arg8[%c0_167, %c0_168] : memref<2x352xf32, #tpu.memory_space<vmem>>, vector<1x256xf32>
      %377 = vector.broadcast %375 : f32 to vector<1x256xf32>
      %378 = arith.mulf %377, %376 : vector<1x256xf32>
      %379 = arith.addf %363, %378 : vector<1x256xf32>
      %c11 = arith.constant 11 : index
      %380 = memref.load %arg3[%c11] : memref<98xf32, #tpu.memory_space<smem>>
      %c0_169 = arith.constant 0 : index
      %c16_170 = arith.constant 16 : index
      %381 = vector.load %arg8[%c0_169, %c16_170] : memref<2x352xf32, #tpu.memory_space<vmem>>, vector<1x256xf32>
      %382 = vector.broadcast %380 : f32 to vector<1x256xf32>
      %383 = arith.mulf %382, %381 : vector<1x256xf32>
      %384 = arith.addf %358, %383 : vector<1x256xf32>
      %c18 = arith.constant 18 : index
      %385 = memref.load %arg3[%c18] : memref<98xf32, #tpu.memory_space<smem>>
      %c0_171 = arith.constant 0 : index
      %c32_172 = arith.constant 32 : index
      %386 = vector.load %arg8[%c0_171, %c32_172] : memref<2x352xf32, #tpu.memory_space<vmem>>, vector<1x256xf32>
      %387 = vector.broadcast %385 : f32 to vector<1x256xf32>
      %388 = arith.mulf %387, %386 : vector<1x256xf32>
      %389 = arith.addf %379, %388 : vector<1x256xf32>
      %c25 = arith.constant 25 : index
      %390 = memref.load %arg3[%c25] : memref<98xf32, #tpu.memory_space<smem>>
      %c0_173 = arith.constant 0 : index
      %c48_174 = arith.constant 48 : index
      %391 = vector.load %arg8[%c0_173, %c48_174] : memref<2x352xf32, #tpu.memory_space<vmem>>, vector<1x256xf32>
      %392 = vector.broadcast %390 : f32 to vector<1x256xf32>
      %393 = arith.mulf %392, %391 : vector<1x256xf32>
      %394 = arith.addf %384, %393 : vector<1x256xf32>
      %c32_175 = arith.constant 32 : index
      %395 = memref.load %arg3[%c32_175] : memref<98xf32, #tpu.memory_space<smem>>
      %c0_176 = arith.constant 0 : index
      %c64_177 = arith.constant 64 : index
      %396 = vector.load %arg8[%c0_176, %c64_177] : memref<2x352xf32, #tpu.memory_space<vmem>>, vector<1x256xf32>
      %397 = vector.broadcast %395 : f32 to vector<1x256xf32>
      %398 = arith.mulf %397, %396 : vector<1x256xf32>
      %399 = arith.addf %389, %398 : vector<1x256xf32>
      %c39 = arith.constant 39 : index
      %400 = memref.load %arg3[%c39] : memref<98xf32, #tpu.memory_space<smem>>
      %c0_178 = arith.constant 0 : index
      %c80_179 = arith.constant 80 : index
      %401 = vector.load %arg8[%c0_178, %c80_179] : memref<2x352xf32, #tpu.memory_space<vmem>>, vector<1x256xf32>
      %402 = vector.broadcast %400 : f32 to vector<1x256xf32>
      %403 = arith.mulf %402, %401 : vector<1x256xf32>
      %404 = arith.addf %394, %403 : vector<1x256xf32>
      %c46 = arith.constant 46 : index
      %405 = memref.load %arg3[%c46] : memref<98xf32, #tpu.memory_space<smem>>
      %c0_180 = arith.constant 0 : index
      %c96_181 = arith.constant 96 : index
      %406 = vector.load %arg8[%c0_180, %c96_181] : memref<2x352xf32, #tpu.memory_space<vmem>>, vector<1x256xf32>
      %407 = vector.broadcast %405 : f32 to vector<1x256xf32>
      %408 = arith.mulf %407, %406 : vector<1x256xf32>
      %409 = arith.addf %399, %408 : vector<1x256xf32>
      %c53 = arith.constant 53 : index
      %410 = memref.load %arg3[%c53] : memref<98xf32, #tpu.memory_space<smem>>
      %c1_182 = arith.constant 1 : index
      %c0_183 = arith.constant 0 : index
      %411 = vector.load %arg8[%c1_182, %c0_183] : memref<2x352xf32, #tpu.memory_space<vmem>>, vector<1x256xf32>
      %412 = vector.broadcast %410 : f32 to vector<1x256xf32>
      %413 = arith.mulf %412, %411 : vector<1x256xf32>
      %414 = arith.addf %404, %413 : vector<1x256xf32>
      %c60 = arith.constant 60 : index
      %415 = memref.load %arg3[%c60] : memref<98xf32, #tpu.memory_space<smem>>
      %c1_184 = arith.constant 1 : index
      %c16_185 = arith.constant 16 : index
      %416 = vector.load %arg8[%c1_184, %c16_185] : memref<2x352xf32, #tpu.memory_space<vmem>>, vector<1x256xf32>
      %417 = vector.broadcast %415 : f32 to vector<1x256xf32>
      %418 = arith.mulf %417, %416 : vector<1x256xf32>
      %419 = arith.addf %409, %418 : vector<1x256xf32>
      %c67 = arith.constant 67 : index
      %420 = memref.load %arg3[%c67] : memref<98xf32, #tpu.memory_space<smem>>
      %c1_186 = arith.constant 1 : index
      %c32_187 = arith.constant 32 : index
      %421 = vector.load %arg8[%c1_186, %c32_187] : memref<2x352xf32, #tpu.memory_space<vmem>>, vector<1x256xf32>
      %422 = vector.broadcast %420 : f32 to vector<1x256xf32>
      %423 = arith.mulf %422, %421 : vector<1x256xf32>
      %424 = arith.addf %414, %423 : vector<1x256xf32>
      %c74 = arith.constant 74 : index
      %425 = memref.load %arg3[%c74] : memref<98xf32, #tpu.memory_space<smem>>
      %c1_188 = arith.constant 1 : index
      %c48_189 = arith.constant 48 : index
      %426 = vector.load %arg8[%c1_188, %c48_189] : memref<2x352xf32, #tpu.memory_space<vmem>>, vector<1x256xf32>
      %427 = vector.broadcast %425 : f32 to vector<1x256xf32>
      %428 = arith.mulf %427, %426 : vector<1x256xf32>
      %429 = arith.addf %419, %428 : vector<1x256xf32>
      %c81 = arith.constant 81 : index
      %430 = memref.load %arg3[%c81] : memref<98xf32, #tpu.memory_space<smem>>
      %c1_190 = arith.constant 1 : index
      %c64_191 = arith.constant 64 : index
      %431 = vector.load %arg8[%c1_190, %c64_191] : memref<2x352xf32, #tpu.memory_space<vmem>>, vector<1x256xf32>
      %432 = vector.broadcast %430 : f32 to vector<1x256xf32>
      %433 = arith.mulf %432, %431 : vector<1x256xf32>
      %434 = arith.addf %424, %433 : vector<1x256xf32>
      %c88 = arith.constant 88 : index
      %435 = memref.load %arg3[%c88] : memref<98xf32, #tpu.memory_space<smem>>
      %c1_192 = arith.constant 1 : index
      %c80_193 = arith.constant 80 : index
      %436 = vector.load %arg8[%c1_192, %c80_193] : memref<2x352xf32, #tpu.memory_space<vmem>>, vector<1x256xf32>
      %437 = vector.broadcast %435 : f32 to vector<1x256xf32>
      %438 = arith.mulf %437, %436 : vector<1x256xf32>
      %439 = arith.addf %429, %438 : vector<1x256xf32>
      %c95 = arith.constant 95 : index
      %440 = memref.load %arg3[%c95] : memref<98xf32, #tpu.memory_space<smem>>
      %c1_194 = arith.constant 1 : index
      %c96_195 = arith.constant 96 : index
      %441 = vector.load %arg8[%c1_194, %c96_195] : memref<2x352xf32, #tpu.memory_space<vmem>>, vector<1x256xf32>
      %442 = vector.broadcast %440 : f32 to vector<1x256xf32>
      %443 = arith.mulf %442, %441 : vector<1x256xf32>
      %444 = arith.addf %434, %443 : vector<1x256xf32>
      %c-2_i32 = arith.constant -2 : i32
      %445 = vector.broadcast %c-2_i32 : i32 to vector<1x352xi32>
      %446 = arith.cmpi sge, %31, %445 : vector<1x352xi32>
      %c14_i32 = arith.constant 14 : i32
      %447 = vector.broadcast %c14_i32 : i32 to vector<1x352xi32>
      %448 = arith.cmpi slt, %31, %447 : vector<1x352xi32>
      %449 = arith.andi %446, %448 : vector<1x352xi1>
      %c0_196 = arith.constant 0 : index
      %c5 = arith.constant 5 : index
      %450 = vector.load %arg7[%c0_196, %c5] : memref<2x358xf32, #tpu.memory_space<vmem>>, vector<2x352xf32>
      %cst_197 = arith.constant 0.000000e+00 : f32
      %451 = vector.shape_cast %449 : vector<1x352xi1> to vector<1x352xi1>
      %452 = vector.broadcast %451 : vector<1x352xi1> to vector<2x352xi1>
      %453 = vector.broadcast %cst_197 : f32 to vector<2x352xf32>
      %454 = arith.select %452, %450, %453 : vector<2x352xi1>, vector<2x352xf32>
      %c0_198 = arith.constant 0 : index
      %c0_199 = arith.constant 0 : index
      %455 = vector.load %arg8[%c0_198, %c0_199] : memref<2x352xf32, #tpu.memory_space<vmem>>, vector<2x352xf32>
      tpu.vector_store %arg8[%c0_198, %c0_199], %454 {strides = array<i32>} : memref<2x352xf32, #tpu.memory_space<vmem>>, vector<2x352xf32>,
      %c5_200 = arith.constant 5 : index
      %456 = memref.load %arg3[%c5_200] : memref<98xf32, #tpu.memory_space<smem>>
      %c0_201 = arith.constant 0 : index
      %c0_202 = arith.constant 0 : index
      %457 = vector.load %arg8[%c0_201, %c0_202] : memref<2x352xf32, #tpu.memory_space<vmem>>, vector<1x256xf32>
      %458 = vector.broadcast %456 : f32 to vector<1x256xf32>
      %459 = arith.mulf %458, %457 : vector<1x256xf32>
      %460 = arith.addf %444, %459 : vector<1x256xf32>
      %c12 = arith.constant 12 : index
      %461 = memref.load %arg3[%c12] : memref<98xf32, #tpu.memory_space<smem>>
      %c0_203 = arith.constant 0 : index
      %c16_204 = arith.constant 16 : index
      %462 = vector.load %arg8[%c0_203, %c16_204] : memref<2x352xf32, #tpu.memory_space<vmem>>, vector<1x256xf32>
      %463 = vector.broadcast %461 : f32 to vector<1x256xf32>
      %464 = arith.mulf %463, %462 : vector<1x256xf32>
      %465 = arith.addf %439, %464 : vector<1x256xf32>
      %c19 = arith.constant 19 : index
      %466 = memref.load %arg3[%c19] : memref<98xf32, #tpu.memory_space<smem>>
      %c0_205 = arith.constant 0 : index
      %c32_206 = arith.constant 32 : index
      %467 = vector.load %arg8[%c0_205, %c32_206] : memref<2x352xf32, #tpu.memory_space<vmem>>, vector<1x256xf32>
      %468 = vector.broadcast %466 : f32 to vector<1x256xf32>
      %469 = arith.mulf %468, %467 : vector<1x256xf32>
      %470 = arith.addf %460, %469 : vector<1x256xf32>
      %c26 = arith.constant 26 : index
      %471 = memref.load %arg3[%c26] : memref<98xf32, #tpu.memory_space<smem>>
      %c0_207 = arith.constant 0 : index
      %c48_208 = arith.constant 48 : index
      %472 = vector.load %arg8[%c0_207, %c48_208] : memref<2x352xf32, #tpu.memory_space<vmem>>, vector<1x256xf32>
      %473 = vector.broadcast %471 : f32 to vector<1x256xf32>
      %474 = arith.mulf %473, %472 : vector<1x256xf32>
      %475 = arith.addf %465, %474 : vector<1x256xf32>
      %c33 = arith.constant 33 : index
      %476 = memref.load %arg3[%c33] : memref<98xf32, #tpu.memory_space<smem>>
      %c0_209 = arith.constant 0 : index
      %c64_210 = arith.constant 64 : index
      %477 = vector.load %arg8[%c0_209, %c64_210] : memref<2x352xf32, #tpu.memory_space<vmem>>, vector<1x256xf32>
      %478 = vector.broadcast %476 : f32 to vector<1x256xf32>
      %479 = arith.mulf %478, %477 : vector<1x256xf32>
      %480 = arith.addf %470, %479 : vector<1x256xf32>
      %c40 = arith.constant 40 : index
      %481 = memref.load %arg3[%c40] : memref<98xf32, #tpu.memory_space<smem>>
      %c0_211 = arith.constant 0 : index
      %c80_212 = arith.constant 80 : index
      %482 = vector.load %arg8[%c0_211, %c80_212] : memref<2x352xf32, #tpu.memory_space<vmem>>, vector<1x256xf32>
      %483 = vector.broadcast %481 : f32 to vector<1x256xf32>
      %484 = arith.mulf %483, %482 : vector<1x256xf32>
      %485 = arith.addf %475, %484 : vector<1x256xf32>
      %c47 = arith.constant 47 : index
      %486 = memref.load %arg3[%c47] : memref<98xf32, #tpu.memory_space<smem>>
      %c0_213 = arith.constant 0 : index
      %c96_214 = arith.constant 96 : index
      %487 = vector.load %arg8[%c0_213, %c96_214] : memref<2x352xf32, #tpu.memory_space<vmem>>, vector<1x256xf32>
      %488 = vector.broadcast %486 : f32 to vector<1x256xf32>
      %489 = arith.mulf %488, %487 : vector<1x256xf32>
      %490 = arith.addf %480, %489 : vector<1x256xf32>
      %c54 = arith.constant 54 : index
      %491 = memref.load %arg3[%c54] : memref<98xf32, #tpu.memory_space<smem>>
      %c1_215 = arith.constant 1 : index
      %c0_216 = arith.constant 0 : index
      %492 = vector.load %arg8[%c1_215, %c0_216] : memref<2x352xf32, #tpu.memory_space<vmem>>, vector<1x256xf32>
      %493 = vector.broadcast %491 : f32 to vector<1x256xf32>
      %494 = arith.mulf %493, %492 : vector<1x256xf32>
      %495 = arith.addf %485, %494 : vector<1x256xf32>
      %c61 = arith.constant 61 : index
      %496 = memref.load %arg3[%c61] : memref<98xf32, #tpu.memory_space<smem>>
      %c1_217 = arith.constant 1 : index
      %c16_218 = arith.constant 16 : index
      %497 = vector.load %arg8[%c1_217, %c16_218] : memref<2x352xf32, #tpu.memory_space<vmem>>, vector<1x256xf32>
      %498 = vector.broadcast %496 : f32 to vector<1x256xf32>
      %499 = arith.mulf %498, %497 : vector<1x256xf32>
      %500 = arith.addf %490, %499 : vector<1x256xf32>
      %c68 = arith.constant 68 : index
      %501 = memref.load %arg3[%c68] : memref<98xf32, #tpu.memory_space<smem>>
      %c1_219 = arith.constant 1 : index
      %c32_220 = arith.constant 32 : index
      %502 = vector.load %arg8[%c1_219, %c32_220] : memref<2x352xf32, #tpu.memory_space<vmem>>, vector<1x256xf32>
      %503 = vector.broadcast %501 : f32 to vector<1x256xf32>
      %504 = arith.mulf %503, %502 : vector<1x256xf32>
      %505 = arith.addf %495, %504 : vector<1x256xf32>
      %c75 = arith.constant 75 : index
      %506 = memref.load %arg3[%c75] : memref<98xf32, #tpu.memory_space<smem>>
      %c1_221 = arith.constant 1 : index
      %c48_222 = arith.constant 48 : index
      %507 = vector.load %arg8[%c1_221, %c48_222] : memref<2x352xf32, #tpu.memory_space<vmem>>, vector<1x256xf32>
      %508 = vector.broadcast %506 : f32 to vector<1x256xf32>
      %509 = arith.mulf %508, %507 : vector<1x256xf32>
      %510 = arith.addf %500, %509 : vector<1x256xf32>
      %c82 = arith.constant 82 : index
      %511 = memref.load %arg3[%c82] : memref<98xf32, #tpu.memory_space<smem>>
      %c1_223 = arith.constant 1 : index
      %c64_224 = arith.constant 64 : index
      %512 = vector.load %arg8[%c1_223, %c64_224] : memref<2x352xf32, #tpu.memory_space<vmem>>, vector<1x256xf32>
      %513 = vector.broadcast %511 : f32 to vector<1x256xf32>
      %514 = arith.mulf %513, %512 : vector<1x256xf32>
      %515 = arith.addf %505, %514 : vector<1x256xf32>
      %c89 = arith.constant 89 : index
      %516 = memref.load %arg3[%c89] : memref<98xf32, #tpu.memory_space<smem>>
      %c1_225 = arith.constant 1 : index
      %c80_226 = arith.constant 80 : index
      %517 = vector.load %arg8[%c1_225, %c80_226] : memref<2x352xf32, #tpu.memory_space<vmem>>, vector<1x256xf32>
      %518 = vector.broadcast %516 : f32 to vector<1x256xf32>
      %519 = arith.mulf %518, %517 : vector<1x256xf32>
      %520 = arith.addf %510, %519 : vector<1x256xf32>
      %c96_227 = arith.constant 96 : index
      %521 = memref.load %arg3[%c96_227] : memref<98xf32, #tpu.memory_space<smem>>
      %c1_228 = arith.constant 1 : index
      %c96_229 = arith.constant 96 : index
      %522 = vector.load %arg8[%c1_228, %c96_229] : memref<2x352xf32, #tpu.memory_space<vmem>>, vector<1x256xf32>
      %523 = vector.broadcast %521 : f32 to vector<1x256xf32>
      %524 = arith.mulf %523, %522 : vector<1x256xf32>
      %525 = arith.addf %515, %524 : vector<1x256xf32>
      %c-3_i32 = arith.constant -3 : i32
      %526 = vector.broadcast %c-3_i32 : i32 to vector<1x352xi32>
      %527 = arith.cmpi sge, %31, %526 : vector<1x352xi32>
      %c13_i32 = arith.constant 13 : i32
      %528 = vector.broadcast %c13_i32 : i32 to vector<1x352xi32>
      %529 = arith.cmpi slt, %31, %528 : vector<1x352xi32>
      %530 = arith.andi %527, %529 : vector<1x352xi1>
      %c0_230 = arith.constant 0 : index
      %c6 = arith.constant 6 : index
      %531 = vector.load %arg7[%c0_230, %c6] : memref<2x358xf32, #tpu.memory_space<vmem>>, vector<2x352xf32>
      %cst_231 = arith.constant 0.000000e+00 : f32
      %532 = vector.shape_cast %530 : vector<1x352xi1> to vector<1x352xi1>
      %533 = vector.broadcast %532 : vector<1x352xi1> to vector<2x352xi1>
      %534 = vector.broadcast %cst_231 : f32 to vector<2x352xf32>
      %535 = arith.select %533, %531, %534 : vector<2x352xi1>, vector<2x352xf32>
      %c0_232 = arith.constant 0 : index
      %c0_233 = arith.constant 0 : index
      %536 = vector.load %arg8[%c0_232, %c0_233] : memref<2x352xf32, #tpu.memory_space<vmem>>, vector<2x352xf32>
      tpu.vector_store %arg8[%c0_232, %c0_233], %535 {strides = array<i32>} : memref<2x352xf32, #tpu.memory_space<vmem>>, vector<2x352xf32>,
      %c6_234 = arith.constant 6 : index
      %537 = memref.load %arg3[%c6_234] : memref<98xf32, #tpu.memory_space<smem>>
      %c0_235 = arith.constant 0 : index
      %c0_236 = arith.constant 0 : index
      %538 = vector.load %arg8[%c0_235, %c0_236] : memref<2x352xf32, #tpu.memory_space<vmem>>, vector<1x256xf32>
      %539 = vector.broadcast %537 : f32 to vector<1x256xf32>
      %540 = arith.mulf %539, %538 : vector<1x256xf32>
      %541 = arith.addf %525, %540 : vector<1x256xf32>
      %c13 = arith.constant 13 : index
      %542 = memref.load %arg3[%c13] : memref<98xf32, #tpu.memory_space<smem>>
      %c0_237 = arith.constant 0 : index
      %c16_238 = arith.constant 16 : index
      %543 = vector.load %arg8[%c0_237, %c16_238] : memref<2x352xf32, #tpu.memory_space<vmem>>, vector<1x256xf32>
      %544 = vector.broadcast %542 : f32 to vector<1x256xf32>
      %545 = arith.mulf %544, %543 : vector<1x256xf32>
      %546 = arith.addf %520, %545 : vector<1x256xf32>
      %c20 = arith.constant 20 : index
      %547 = memref.load %arg3[%c20] : memref<98xf32, #tpu.memory_space<smem>>
      %c0_239 = arith.constant 0 : index
      %c32_240 = arith.constant 32 : index
      %548 = vector.load %arg8[%c0_239, %c32_240] : memref<2x352xf32, #tpu.memory_space<vmem>>, vector<1x256xf32>
      %549 = vector.broadcast %547 : f32 to vector<1x256xf32>
      %550 = arith.mulf %549, %548 : vector<1x256xf32>
      %551 = arith.addf %541, %550 : vector<1x256xf32>
      %c27 = arith.constant 27 : index
      %552 = memref.load %arg3[%c27] : memref<98xf32, #tpu.memory_space<smem>>
      %c0_241 = arith.constant 0 : index
      %c48_242 = arith.constant 48 : index
      %553 = vector.load %arg8[%c0_241, %c48_242] : memref<2x352xf32, #tpu.memory_space<vmem>>, vector<1x256xf32>
      %554 = vector.broadcast %552 : f32 to vector<1x256xf32>
      %555 = arith.mulf %554, %553 : vector<1x256xf32>
      %556 = arith.addf %546, %555 : vector<1x256xf32>
      %c34 = arith.constant 34 : index
      %557 = memref.load %arg3[%c34] : memref<98xf32, #tpu.memory_space<smem>>
      %c0_243 = arith.constant 0 : index
      %c64_244 = arith.constant 64 : index
      %558 = vector.load %arg8[%c0_243, %c64_244] : memref<2x352xf32, #tpu.memory_space<vmem>>, vector<1x256xf32>
      %559 = vector.broadcast %557 : f32 to vector<1x256xf32>
      %560 = arith.mulf %559, %558 : vector<1x256xf32>
      %561 = arith.addf %551, %560 : vector<1x256xf32>
      %c41 = arith.constant 41 : index
      %562 = memref.load %arg3[%c41] : memref<98xf32, #tpu.memory_space<smem>>
      %c0_245 = arith.constant 0 : index
      %c80_246 = arith.constant 80 : index
      %563 = vector.load %arg8[%c0_245, %c80_246] : memref<2x352xf32, #tpu.memory_space<vmem>>, vector<1x256xf32>
      %564 = vector.broadcast %562 : f32 to vector<1x256xf32>
      %565 = arith.mulf %564, %563 : vector<1x256xf32>
      %566 = arith.addf %556, %565 : vector<1x256xf32>
      %c48_247 = arith.constant 48 : index
      %567 = memref.load %arg3[%c48_247] : memref<98xf32, #tpu.memory_space<smem>>
      %c0_248 = arith.constant 0 : index
      %c96_249 = arith.constant 96 : index
      %568 = vector.load %arg8[%c0_248, %c96_249] : memref<2x352xf32, #tpu.memory_space<vmem>>, vector<1x256xf32>
      %569 = vector.broadcast %567 : f32 to vector<1x256xf32>
      %570 = arith.mulf %569, %568 : vector<1x256xf32>
      %571 = arith.addf %561, %570 : vector<1x256xf32>
      %c55 = arith.constant 55 : index
      %572 = memref.load %arg3[%c55] : memref<98xf32, #tpu.memory_space<smem>>
      %c1_250 = arith.constant 1 : index
      %c0_251 = arith.constant 0 : index
      %573 = vector.load %arg8[%c1_250, %c0_251] : memref<2x352xf32, #tpu.memory_space<vmem>>, vector<1x256xf32>
      %574 = vector.broadcast %572 : f32 to vector<1x256xf32>
      %575 = arith.mulf %574, %573 : vector<1x256xf32>
      %576 = arith.addf %566, %575 : vector<1x256xf32>
      %c62 = arith.constant 62 : index
      %577 = memref.load %arg3[%c62] : memref<98xf32, #tpu.memory_space<smem>>
      %c1_252 = arith.constant 1 : index
      %c16_253 = arith.constant 16 : index
      %578 = vector.load %arg8[%c1_252, %c16_253] : memref<2x352xf32, #tpu.memory_space<vmem>>, vector<1x256xf32>
      %579 = vector.broadcast %577 : f32 to vector<1x256xf32>
      %580 = arith.mulf %579, %578 : vector<1x256xf32>
      %581 = arith.addf %571, %580 : vector<1x256xf32>
      %c69 = arith.constant 69 : index
      %582 = memref.load %arg3[%c69] : memref<98xf32, #tpu.memory_space<smem>>
      %c1_254 = arith.constant 1 : index
      %c32_255 = arith.constant 32 : index
      %583 = vector.load %arg8[%c1_254, %c32_255] : memref<2x352xf32, #tpu.memory_space<vmem>>, vector<1x256xf32>
      %584 = vector.broadcast %582 : f32 to vector<1x256xf32>
      %585 = arith.mulf %584, %583 : vector<1x256xf32>
      %586 = arith.addf %576, %585 : vector<1x256xf32>
      %c76 = arith.constant 76 : index
      %587 = memref.load %arg3[%c76] : memref<98xf32, #tpu.memory_space<smem>>
      %c1_256 = arith.constant 1 : index
      %c48_257 = arith.constant 48 : index
      %588 = vector.load %arg8[%c1_256, %c48_257] : memref<2x352xf32, #tpu.memory_space<vmem>>, vector<1x256xf32>
      %589 = vector.broadcast %587 : f32 to vector<1x256xf32>
      %590 = arith.mulf %589, %588 : vector<1x256xf32>
      %591 = arith.addf %581, %590 : vector<1x256xf32>
      %c83 = arith.constant 83 : index
      %592 = memref.load %arg3[%c83] : memref<98xf32, #tpu.memory_space<smem>>
      %c1_258 = arith.constant 1 : index
      %c64_259 = arith.constant 64 : index
      %593 = vector.load %arg8[%c1_258, %c64_259] : memref<2x352xf32, #tpu.memory_space<vmem>>, vector<1x256xf32>
      %594 = vector.broadcast %592 : f32 to vector<1x256xf32>
      %595 = arith.mulf %594, %593 : vector<1x256xf32>
      %596 = arith.addf %586, %595 : vector<1x256xf32>
      %c90 = arith.constant 90 : index
      %597 = memref.load %arg3[%c90] : memref<98xf32, #tpu.memory_space<smem>>
      %c1_260 = arith.constant 1 : index
      %c80_261 = arith.constant 80 : index
      %598 = vector.load %arg8[%c1_260, %c80_261] : memref<2x352xf32, #tpu.memory_space<vmem>>, vector<1x256xf32>
      %599 = vector.broadcast %597 : f32 to vector<1x256xf32>
      %600 = arith.mulf %599, %598 : vector<1x256xf32>
      %601 = arith.addf %591, %600 : vector<1x256xf32>
      %c97 = arith.constant 97 : index
      %602 = memref.load %arg3[%c97] : memref<98xf32, #tpu.memory_space<smem>>
      %c1_262 = arith.constant 1 : index
      %c96_263 = arith.constant 96 : index
      %603 = vector.load %arg8[%c1_262, %c96_263] : memref<2x352xf32, #tpu.memory_space<vmem>>, vector<1x256xf32>
      %604 = vector.broadcast %602 : f32 to vector<1x256xf32>
      %605 = arith.mulf %604, %603 : vector<1x256xf32>
      %606 = arith.addf %596, %605 : vector<1x256xf32>
      %607 = arith.addf %601, %606 : vector<1x256xf32>
      %608 = arith.negf %607 : vector<1x256xf32>
      %609 = math.exp %608 : vector<1x256xf32>
      %cst_264 = arith.constant 1.000000e+00 : f32
      %610 = vector.broadcast %cst_264 : f32 to vector<1x256xf32>
      %611 = arith.addf %610, %609 : vector<1x256xf32>
      %612 = arith.divf %610, %611 : vector<1x256xf32>
      %c0_265 = arith.constant 0 : index
      %c0_266 = arith.constant 0 : index
      %c0_267 = arith.constant 0 : index
      %613 = vector.load %arg4[%c0_265, %c0_266, %c0_267] : memref<1x1x256xf32, #tpu.memory_space<vmem>>, vector<1x1x256xf32>
      %614 = vector.shape_cast %613 : vector<1x1x256xf32> to vector<1x256xf32>
      %615 = vector.shape_cast %612 : vector<1x256xf32> to vector<1x1x256xf32>
      tpu.vector_store %arg4[%c0_265, %c0_266, %c0_267], %615 {strides = array<i32>} : memref<1x1x256xf32, #tpu.memory_space<vmem>>, vector<1x1x256xf32>,
    } else {
    }
    return
  }
  func.func @transform_0(%arg0: i32, %arg1: i32) -> (i32, i32, i32) {
    %c0_i32 = arith.constant 0 : i32
    %c0_i32_0 = arith.constant 0 : i32
    return %arg0, %arg1, %c0_i32 : i32, i32, i32
  }
  func.func @transform_1(%arg0: i32, %arg1: i32) -> i32 {
    %c0_i32 = arith.constant 0 : i32
    %c0_i32_0 = arith.constant 0 : i32
    return %c0_i32 : i32
  }
  func.func @transform_2(%arg0: i32, %arg1: i32) -> (i32, i32, i32) {
    %c0_i32 = arith.constant 0 : i32
    %c0_i32_0 = arith.constant 0 : i32
    %c0_i32_1 = arith.constant 0 : i32
    return %arg0, %c0_i32, %c0_i32_0 : i32, i32, i32
  }
}

</mosaic_0001>

<llo_original>
// kernel: tpu_custom_call.1
$region0: #{tpu_custom_call.1}
  #allocation0 [shape = 'u32[]', space=smem, size = 0x4, offset = 0x4, fixed_abs, tag = 'smem constant byte address 0x4 - core index']
  #allocation1 [shape = 'u32[72,128]{1,0:T(1,128)}', space=vmem, size = 0x9000, scoped, tag = 'internal scratch']
  #allocation2 [shape = 'f32[1,256]{1,0:T(1,128)}', space=vmem, size = 0x400, scoped, tag = 'scratch operand']
  #allocation3 [shape = 'f32[1,256]{1,0:T(1,128)}', space=vmem, size = 0x400, scoped, tag = 'scratch operand']
  #allocation4 [shape = 'f32[2,358]{1,0:T(2,128)}', space=vmem, size = 0xc00, scoped, tag = 'scratch operand']
  #allocation5 [shape = 'f32[2,352]{1,0:T(2,128)}', space=vmem, size = 0xc00, scoped, tag = 'scratch operand']
  %s0 = inlined_call_operand.hbm [shape: f32[2,4,256], index: 0, kind: input, shape index: {}]
  %s1 = inlined_call_operand.hbm [shape: f32[98], index: 1, kind: input, shape index: {}]
  %s2 = inlined_call_operand.hbm [shape: f32[2,1,256], index: 2, kind: output, shape index: {}]
  %s3 = sld [smem:[#allocation0]]
  $region57: #{tpu_custom_call.1} parent=0
    _
  %s5 = ssub.s32 1, %s3
  %s6 = scalar_select 0, %s5, %s3
  $region1: #{tpu_custom_call.1} parent=0
    #allocation6 [shape = 'u8[8192]{0}', space=vmem, size = 0x2000, scoped, tag = 'input window, operand 0']
    #allocation7 [shape = 's32[2]{0}', space=sflag, size = 0x8, scoped, tag = 'scoped memory for tpu_custom_call.1']
    #allocation8 [shape = 's32[2]{0}', space=sflag, size = 0x8, scoped, tag = 'scoped memory for tpu_custom_call.1']
    #allocation9 [shape = 's32[2]{0}', space=sflag, size = 0x8, scoped, tag = 'scoped memory for tpu_custom_call.1']
    #allocation10 [shape = 'u8[512]{0}', space=smem, size = 0x200, scoped, tag = 'input window, operand 1, single buffered']
    #allocation11 [shape = 'u8[2048]{0}', space=vmem, size = 0x800, scoped, tag = 'output window, operand 0']
    %7 = vsyncpa [#allocation7], 0
    %s8 = scalar_lea.sflag [#allocation7], 1
    %9 = vsyncpa %s8, 0
    %10 = vsyncpa [#allocation9], 0
    %11 = vsyncpa [#allocation8], 0
    %s12 = scalar_lea.sflag [#allocation8], 1
    %13 = vsyncpa %s12, 0
    loop: start=0, step=1, limit=4
    $region2: #{tpu_custom_call.1} parent=1 // loop_pre_header
      _
    $region3: #{tpu_custom_call.1} parent=1 // loop_header
      %s15 = sphi 0, %s19
      %p16 = scmp.ge.s32.totalorder %s15, 4
      %s22 = sphi 0, %s34
      %s23 = sphi 0, %s30
      %s24 = sphi 0, %s22
      %s25 = sphi 0, %s23
      %s26 = sphi 0, %s24
      %s27 = sphi 0, %s25
      %s39 = sphi 0, %s41
      %s42 = sphi 0, %s39
      %s43 = sphi 0, %s42
      %s59 = sphi 0, %s43
      %s63 = sphi 0, %s63
      %s65 = sphi 0, %s63
      %s66 = sphi 0, %s65
      %s80 = sphi 0, %s66
      %s86 = sphi 0, %s88
      %s89 = sphi 0, %s86
      %s90 = sphi 0, %s89
      %s106 = sphi 0, %s90
    $region4: #{tpu_custom_call.1} parent=1 // loop_header_branch
      %18 = sbr.rel (%p16) target = $region8
    $region5: #{tpu_custom_call.1} parent=1 // loop_body
      %s20 = ssub.s32 %s15, 1
      %s21 = ssub.s32 %s15, 2
      %s28 = sadd.s32 1, %s23
      %p29 = scmp.ge.s32.totalorder %s28, 1
      %s30 = scalar_select %p29, 0, %s28
      %s31 = sadd.s32 1, %s22
      %s32 = scalar_select %p29, %s31, %s22
      %p33 = scmp.ge.s32.totalorder %s32, 2
      %s34 = scalar_select %p33, 0, %s32
      %s35 = ssub.s32 %s22, %s34
      %s36 = ssub.s32 %s23, %s30
      %s37 = sor.u32 %s35, %s36
      %p38 = scmp.eq.s32.totalorder %s37, 0
      %s40 = sadd.s32 %s39, 1
      %s41 = scalar_select %p38, %s39, %s40
      %p44 = pneg %p38
      %p45 = scmp.eq.s32.totalorder %s15, 1
      %p46 = por %p44, %p45
      %p47 = scmp.ne.s32.totalorder %s39, %s42
      %p48 = scmp.eq.s32.totalorder %s15, 0
      %p49 = por %p47, %p48
      %p50 = scmp.ne.s32.totalorder %s39, %s42
      %p51 = scmp.eq.s32.totalorder %s20, 1
      %p52 = por %p50, %p51
      %p53 = scmp.ne.s32.totalorder %s42, %s43
      %p54 = scmp.eq.s32.totalorder %s20, 0
      %p55 = por %p53, %p54
      %p56 = scmp.ne.s32.totalorder %s42, %s43
      %p57 = scmp.eq.s32.totalorder %s21, 1
      %p58 = por %p56, %p57
      %p60 = scmp.ne.s32.totalorder %s43, %s59
      %p61 = scmp.eq.s32.totalorder %s21, 0
      %p62 = por %p60, %p61
      %s64 = sadd.s32 %s63, 1
      %p67 = scmp.eq.s32.totalorder %s15, 1
      %p68 = scmp.ne.s32.totalorder %s63, %s65
      %p69 = scmp.eq.s32.totalorder %s15, 0
      %p70 = por %p68, %p69
      %p71 = scmp.ne.s32.totalorder %s63, %s65
      %p72 = scmp.eq.s32.totalorder %s20, 1
      %p73 = por %p71, %p72
      %p74 = scmp.ne.s32.totalorder %s65, %s66
      %p75 = scmp.eq.s32.totalorder %s20, 0
      %p76 = por %p74, %p75
      %p77 = scmp.ne.s32.totalorder %s65, %s66
      %p78 = scmp.eq.s32.totalorder %s21, 1
      %p79 = por %p77, %p78
      %p81 = scmp.ne.s32.totalorder %s66, %s80
      %p82 = scmp.eq.s32.totalorder %s21, 0
      %p83 = por %p81, %p82
      %s84 = ssub.s32 %s22, %s34
      %p85 = scmp.eq.s32.totalorder %s84, 0
      %s87 = sadd.s32 %s86, 1
      %s88 = scalar_select %p85, %s86, %s87
      %p91 = pneg %p85
      %p92 = scmp.eq.s32.totalorder %s15, 1
      %p93 = por %p91, %p92
      %p94 = scmp.ne.s32.totalorder %s86, %s89
      %p95 = scmp.eq.s32.totalorder %s15, 0
      %p96 = por %p94, %p95
      %p97 = scmp.ne.s32.totalorder %s86, %s89
      %p98 = scmp.eq.s32.totalorder %s20, 1
      %p99 = por %p97, %p98
      %p100 = scmp.ne.s32.totalorder %s89, %s90
      %p101 = scmp.eq.s32.totalorder %s20, 0
      %p102 = por %p100, %p101
      %p103 = scmp.ne.s32.totalorder %s89, %s90
      %p104 = scmp.eq.s32.totalorder %s21, 1
      %p105 = por %p103, %p104
      %p107 = scmp.ne.s32.totalorder %s90, %s106
      %p108 = scmp.eq.s32.totalorder %s21, 0
      %p109 = por %p107, %p108
      %p110 = scmp.le.s32.totalorder 1, %s15
      %p111 = scmp.lt.s32.totalorder %s15, 3
      %p112 = pnand %p110, %p111
      %p113 = pneg %p112
      // Predicated region
      $region9: #{tpu_custom_call.1} parent=5 // pred_check
        _
      $region10: #{tpu_custom_call.1} parent=5 // pred_check_branch
        %115 = sbr.rel (%p112) target = $region12
      $region11: #{tpu_custom_call.1} parent=5 // pred_region
        %s116 = ssub.s32 %s15, 1
        // Predicated region
        $region13: #{tpu_custom_call.1} parent=11 // pred_check
          %p117 = pneg %p76
        $region14: #{tpu_custom_call.1} parent=11 // pred_check_branch
          %119 = sbr.rel (%p117) target = $region16
        $region15: #{tpu_custom_call.1} parent=11 // pred_region
          %121 = vsyncadd [#allocation9], 0
          %s123 = sshll.u32 %s1, 4
          %s124 = int_to_ptr.hbm [resolvable:$true] %s123
          %126 = dma.hbm_to_smem %s124, 16, [#allocation10], [#allocation9]
        $region16: #{tpu_custom_call.1} parent=11 // pred_fallthru
          _
      $region12: #{tpu_custom_call.1} parent=5 // pred_fallthru
        _
      %p127 = scmp.lt.s32.totalorder %s15, 2
      // Predicated region
      $region17: #{tpu_custom_call.1} parent=5 // pred_check
        %p128 = pneg %p127
      $region18: #{tpu_custom_call.1} parent=5 // pred_check_branch
        %130 = sbr.rel (%p128) target = $region20
      $region19: #{tpu_custom_call.1} parent=5 // pred_region
        // Predicated region
        $region21: #{tpu_custom_call.1} parent=19 // pred_check
          %p131 = pneg %p49
        $region22: #{tpu_custom_call.1} parent=19 // pred_check_branch
          %133 = sbr.rel (%p131) target = $region24
        $region23: #{tpu_custom_call.1} parent=19 // pred_region
          %s134 = sand.u32 %s39, 1
          %s135 = scalar_lea.sflag [#allocation7], %s134
          %s136 = sand.u32 %s39, 1
          %s137 = smul.addr %s136, 8
          %s138 = scalar_lea.vmem [#allocation6], %s137
          %140 = vsyncadd %s135, 0
          %s141 = smul.addr %s23, 2
          %s142 = smul.addr %s22, 2
          %s143 = sadd.s32 %s141, %s142
          %s144 = smul.addr %s143, 4
          %s145 = scalar_lea.hbm %s0, %s144
          %s147 = sshll.u32 %s145, 4
          %s148 = int_to_ptr.hbm [resolvable:$true] %s147
          %s149 = sshll.u32 %s138, 4
          %s150 = int_to_ptr.vmem [resolvable:$true] %s149
          %152 = dma.hbm_to_vmem [thread:$0]  %s148, 128, %s150, %s135
        $region24: #{tpu_custom_call.1} parent=19 // pred_fallthru
          _
      $region20: #{tpu_custom_call.1} parent=5 // pred_fallthru
        _
      %p153 = scmp.le.s32.totalorder 1, %s15
      %p154 = scmp.lt.s32.totalorder %s15, 3
      %p155 = pnand %p153, %p154
      %p156 = pneg %p155
      // Predicated region
      $region25: #{tpu_custom_call.1} parent=5 // pred_check
        _
      $region26: #{tpu_custom_call.1} parent=5 // pred_check_branch
        %158 = sbr.rel (%p155) target = $region28
      $region27: #{tpu_custom_call.1} parent=5 // pred_region
        %s159 = ssub.s32 %s15, 1
        %s160 = sand.u32 %s42, 1
        %s161 = scalar_lea.sflag [#allocation7], %s160
        %s162 = sand.u32 %s42, 1
        %s163 = smul.addr %s162, 8
        %s164 = scalar_lea.vmem [#allocation6], %s163
        // Predicated region
        $region29: #{tpu_custom_call.1} parent=27 // pred_check
          %p165 = pneg %p55
        $region30: #{tpu_custom_call.1} parent=27 // pred_check_branch
          %167 = sbr.rel (%p165) target = $region32
        $region31: #{tpu_custom_call.1} parent=27 // pred_region
          %169 = dma.done %s161, 128
        $region32: #{tpu_custom_call.1} parent=27 // pred_fallthru
          _
        // Predicated region
        $region33: #{tpu_custom_call.1} parent=27 // pred_check
          %p170 = pneg %p76
        $region34: #{tpu_custom_call.1} parent=27 // pred_check_branch
          %172 = sbr.rel (%p170) target = $region36
        $region35: #{tpu_custom_call.1} parent=27 // pred_region
          %174 = dma.done [#allocation9], 16
        $region36: #{tpu_custom_call.1} parent=27 // pred_fallthru
          _
        %175 = sfence
        %s176 = sand.u32 %s42, 1
        %s177 = scalar_lea.sflag [#allocation7], %s176
        %s178 = sand.u32 %s42, 1
        %s179 = smul.addr %s178, 8
        %s180 = scalar_lea.vmem [#allocation6], %s179
        %p181 = pneg %p55
        %p182 = pneg %p52
        %p183 = pneg %p76
        %p184 = pneg %p73
        %p185 = pneg %p102
        %p186 = pneg %p99
        %s187 = sand.u32 %s89, 1
        %s188 = scalar_lea.sflag [#allocation8], %s187
        %s189 = sand.u32 %s89, 1
        %s190 = smul.addr %s189, 2
        %s191 = scalar_lea.vmem [#allocation11], %s190
        %v192 = vld [vmem:[%s164] sm:$0xff]
        %194 = vst [vmem:[#allocation1] ss:$2 sm:$0xff] %v192
        %v195 = vld.sshfl [vmem:[#allocation1] sm:$0xff pattern:$0x75316420]
        %v196 = vld.sshfl [vmem:[#allocation1 + $0x8] sm:$0xff pattern:$0x75316420]
        %vm199 = vcmask 1043456
        %v200 = vsel %vm199, %v195, 0.0
        %v201 = vrot.slane %v200, 4
        %v202 = vadd.f32 %v200, %v201
        %v203 = vrot.slane %v202, 2
        %v204 = vadd.f32 %v202, %v203
        %v205 = vrot.slane %v204, 1
        %v206 = vadd.f32 %v204, %v205
        %v207 = vsel %vm199, %v196, 0.0
        %v208 = vrot.slane %v207, 4
        %v209 = vadd.f32 %v207, %v208
        %v210 = vrot.slane %v209, 2
        %v211 = vadd.f32 %v209, %v210
        %v212 = vrot.slane %v211, 1
        %v213 = vadd.f32 %v211, %v212
        %214 = vst [vmem:[#allocation1] ss:$2 sm:$0xff] %v192
        %v215 = vld.sshfl [vmem:[#allocation1] sm:$0xff pattern:$0x75316420]
        %v216 = vld.sshfl [vmem:[#allocation1 + $0x8] sm:$0xff pattern:$0x75316420]
        %v219 = vsel %vm199, %v215, -inf
        %v220 = vrot.slane %v219, 4
        %v221 = vmax.f32 %v219, %v220
        %v222 = vrot.slane %v221, 2
        %v223 = vmax.f32 %v221, %v222
        %v224 = vrot.slane %v223, 1
        %v225 = vmax.f32 %v223, %v224
        %v226 = vsel %vm199, %v216, -inf
        %v227 = vrot.slane %v226, 4
        %v228 = vmax.f32 %v226, %v227
        %v229 = vrot.slane %v228, 2
        %v230 = vmax.f32 %v228, %v229
        %v231 = vrot.slane %v230, 1
        %v232 = vmax.f32 %v230, %v231
        %p233 = scmp.eq.s32.totalorder %s25, 0
        // Predicated region
        $region37: #{tpu_custom_call.1} parent=27 // pred_check
          %p234 = pneg %p233
        $region38: #{tpu_custom_call.1} parent=27 // pred_check_branch
          %236 = sbr.rel (%p234) target = $region40
        $region39: #{tpu_custom_call.1} parent=27 // pred_region
          %v237 = vlaneseq
          %vm238 = vcmp.ge.s32.totalorder %v237, 0
          %vm239 = vcmp.lt.s32.totalorder %v237, 256
          %vm240 = vmand %vm238, %vm239
          %241 = vst.msk [vmem:[#allocation2] sm:$0x3] %vm240, 0.0
          %242 = vst.msk [vmem:[#allocation3] sm:$0x3] %vm240, -inf
          %vm243 = vcmask 410624
          %244 = vst.msk [vmem:[#allocation4] sm:$0x3] %vm243, 0.0
          %vm245 = vcmask 828824
          %246 = vst.msk [vmem:[#allocation4 + $0x4] sm:$0x3] %vm245, 0.0
        $region40: #{tpu_custom_call.1} parent=27 // pred_fallthru
          _
        %v247 = vld [vmem:[#allocation2] sm:$0x3]
        %v250 = vrot.slane %v213, 7
        %vm251 = vcmask 1040384
        %v252 = vsel %vm251, %v206, %v250
        %v254 = vadd.f32 %v247, %v252
        %v255 = vlaneseq
        %vm256 = vcmp.ge.s32.totalorder %v255, 0
        %vm257 = vcmp.lt.s32.totalorder %v255, 256
        %vm258 = vmand %vm256, %vm257
        %259 = vst.msk [vmem:[#allocation2] sm:$0x3] %vm258, %v254
        %v260 = vld [vmem:[#allocation3] sm:$0x3]
        %v263 = vrot.slane %v232, 7
        %v264 = vsel %vm251, %v225, %v263
        %v266 = vmax.f32 %v260, %v264
        %267 = vst.msk [vmem:[#allocation3] sm:$0x3] %vm258, %v266
        // Predicated region
        $region41: #{tpu_custom_call.1} parent=27 // pred_check
          %p268 = pneg %p233
        $region42: #{tpu_custom_call.1} parent=27 // pred_check_branch
          %270 = sbr.rel (%p268) target = $region44
        $region43: #{tpu_custom_call.1} parent=27 // pred_region
          %v271 = vlaneseq
          %v272 = vand.u32 %v271, 127
          %v273 = vadd.s32 %v272, 128
          %v274 = vadd.s32 %v272, 256
          %vm275 = vcmp.lt.s32.totalorder %v272, 0
          %v276 = vsub.s32 0, %v272
          %v277 = vsel %vm275, %v276, %v272
          %v278 = vshrl.u32 %v277, 4
          %v279 = vand.u32 %v277, 15
          %v280 = vsub.s32 0, %v279
          %v281 = vsel %vm275, %v280, %v279
          %vm282 = vcmp.lt.s32.totalorder %v273, 0
          %v283 = vsub.s32 0, %v273
          %v284 = vsel %vm282, %v283, %v273
          %v285 = vshrl.u32 %v284, 4
          %v286 = vand.u32 %v284, 15
          %v287 = vsub.s32 0, %v286
          %v288 = vsel %vm282, %v287, %v286
          %vm289 = vcmp.lt.s32.totalorder %v274, 0
          %v290 = vsub.s32 0, %v274
          %v291 = vsel %vm289, %v290, %v274
          %v292 = vshrl.u32 %v291, 4
          %v293 = vand.u32 %v291, 15
          %v294 = vsub.s32 0, %v293
          %v295 = vsel %vm289, %v294, %v293
          %vm296 = vcmp.ne.s32.totalorder %v281, 0
          %vm297 = vcmp.ne.s32.totalorder %v288, 0
          %vm298 = vcmp.ne.s32.totalorder %v295, 0
          %vm299 = vcmp.lt.s32.totalorder %v281, 0
          %vm300 = vcmp.lt.s32.totalorder %v288, 0
          %vm301 = vcmp.lt.s32.totalorder %v295, 0
          %vm302 = vmand %vm299, %vm296
          %vm303 = vmand %vm300, %vm297
          %vm304 = vmand %vm301, %vm298
          %v305 = vadd.s32 %v281, 16
          %v306 = vadd.s32 %v288, 16
          %v307 = vadd.s32 %v295, 16
          %v308 = vsel %vm302, %v305, %v281
          %v309 = vsel %vm303, %v306, %v288
          %v310 = vsel %vm304, %v307, %v295
          %v311 = vld [vmem:[#allocation2] sm:$0x3]
          %v312 = vmul.f32 %v311, 0.25
          %314 = vrot.lane.b32.xlu0 %v312, 51
          %v315 = vpop.permute.xlu0 %314
          %v316 = vrot.slane %v315, 7
          %vm317 = vcmask 416768
          %v318 = vsel %vm317, %v316, %v315
          %vm320 = vcmp.ge.s32.totalorder %v255, 51
          %vm321 = vcmp.lt.s32.totalorder %v255, 307
          %vm322 = vmand %vm320, %vm321
          %323 = vst.msk [vmem:[#allocation4] ss:$2 sm:$0x7] %vm322, %v318
          %v324 = vld [vmem:[#allocation3] sm:$0x3]
          %326 = vrot.lane.b32.xlu0 %v324, 51
          %v327 = vpop.permute.xlu0 %326
          %v328 = vrot.slane %v327, 7
          %v329 = vsel %vm317, %v328, %v327
          %s331 = scalar_lea.vmem [#allocation4], 1
          %332 = vst.msk [vmem:[%s331] ss:$2 sm:$0x7] %vm322, %v329
          %vm333 = vcmp.ge.s32.totalorder %v308, 3
          %vm334 = vcmp.ge.s32.totalorder %v309, 3
          %vm335 = vcmp.ge.s32.totalorder %v310, 3
          %vm336 = vcmp.lt.s32.totalorder %v308, 19
          %vm337 = vcmp.lt.s32.totalorder %v309, 19
          %vm338 = vcmp.lt.s32.totalorder %v310, 19
          %vm339 = vmand %vm333, %vm336
          %vm340 = vmand %vm334, %vm337
          %vm341 = vmand %vm335, %vm338
          %v342 = vld [vmem:[#allocation4] sm:$0x3f]
          %v343 = vsel %vm339, 1, 0
          %v344 = vsel %vm340, 1, 0
          %v345 = vsel %vm341, 1, 0
          %vm346 = vcmp.eq.s32.totalorder %v343, 1
          %vm347 = vcmp.eq.s32.totalorder %v344, 1
          %vm348 = vcmp.eq.s32.totalorder %v345, 1
          %350 = vst [vmem:[#allocation1] ss:$4 sm:$0xff] %v342
          %v351 = vld.sshfl [vmem:[#allocation1] sm:$0xff pattern:$0x73625140]
          %v352 = vld.sshfl [vmem:[#allocation1 + $0x8] sm:$0xff pattern:$0x73625140]
          %v353 = vld.sshfl [vmem:[#allocation1 + $0x10] sm:$0xff pattern:$0x73625140]
          %v357 = vsel %vm346, %v351, 0.0
          %v358 = vsel %vm347, %v352, 0.0
          %v359 = vsel %vm348, %v353, 0.0
          %v363 = vrot.slane %v358, 6
          %v364 = vrot.slane %v359, 4
          %vm365 = vcmask 1041408
          %v366 = vsel %vm365, %v357, %v363
          %v367 = vsel %vm199, %v366, %v364
          %vm369 = vcmask 1043458
          %vm370 = vmor %vm369, %vm365
          %vm371 = vcmask 783364
          %vm372 = vmor %vm371, %vm370
          %373 = vst.msk [vmem:[#allocation5] sm:$0x3f] %vm372, %v367
          %s374 = sld [smem:[#allocation10]]
          %v375 = vld [vmem:[#allocation5] ss:$2 sm:$0x3]
          %v376 = vstv %s374
          %v377 = vmul.f32 %v376, %v375
          %v378 = vadd.f32 %v377, 0.0
          %s379 = sld [smem:[#allocation10 + $0x7]]
          %v380 = vld [vmem:[#allocation5] ss:$2 sm:$0x7]
          %v381 = vstv %s379
          %v382 = vmul.f32 %v381, %v380
          %v383 = vadd.f32 %v382, 0.0
          %s384 = sld [smem:[#allocation10 + $0xe]]
          %v385 = vstv %s384
          %v386 = vmul.f32 %v385, %v380
          %388 = vrot.lane.b32.xlu0 %v386, 96
          %v389 = vpop.permute.xlu0 %388
          %v390 = vrot.slane %v389, 1
          %vm391 = vcmask 785408
          %v392 = vsel %vm391, %v389, %v390
          %v394 = vadd.f32 %v378, %v392
          %s395 = sld [smem:[#allocation10 + $0x15]]
          %v396 = vstv %s395
          %v397 = vmul.f32 %v396, %v380
          %399 = vrot.lane.b32.xlu0 %v397, 96
          %v400 = vpop.permute.xlu0 %399
          %v401 = vrot.slane %v400, 1
          %v402 = vsel %vm391, %v400, %v401
          %v404 = vadd.f32 %v383, %v402
          %s405 = sld [smem:[#allocation10 + $0x1c]]
          %v406 = vstv %s405
          %v407 = vmul.f32 %v406, %v380
          %409 = vrot.lane.b32.xlu0 %v407, 64
          %v410 = vpop.permute.xlu0 %409
          %v411 = vrot.slane %v410, 1
          %vm412 = vcmask 523264
          %v413 = vsel %vm412, %v410, %v411
          %v415 = vadd.f32 %v394, %v413
          %s416 = sld [smem:[#allocation10 + $0x23]]
          %v417 = vstv %s416
          %v418 = vmul.f32 %v417, %v380
          %420 = vrot.lane.b32.xlu0 %v418, 64
          %v421 = vpop.permute.xlu0 %420
          %v422 = vrot.slane %v421, 1
          %v423 = vsel %vm412, %v421, %v422
          %v425 = vadd.f32 %v404, %v423
          %s426 = sld [smem:[#allocation10 + $0x2a]]
          %v427 = vstv %s426
          %v428 = vmul.f32 %v427, %v380
          %430 = vrot.lane.b32.xlu0 %v428, 32
          %v431 = vpop.permute.xlu0 %430
          %v432 = vrot.slane %v431, 1
          %vm433 = vcmask 261120
          %v434 = vsel %vm433, %v431, %v432
          %v436 = vadd.f32 %v415, %v434
          %s437 = sld [smem:[#allocation10 + $0x31]]
          %s438 = scalar_lea.vmem [#allocation5], 1
          %v439 = vld [vmem:[%s438] ss:$2 sm:$0x3]
          %v440 = vstv %s437
          %v441 = vmul.f32 %v440, %v439
          %443 = vrot.lane.b32.xlu0 %v441, 16
          %v444 = vpop.permute.xlu0 %443
          %v445 = vrot.slane %v444, 7
          %vm446 = vcmask 130048
          %v447 = vsel %vm446, %v445, %v444
          %v449 = vadd.f32 %v425, %v447
          %s450 = sld [smem:[#allocation10 + $0x38]]
          %v451 = vld [vmem:[%s438] ss:$2 sm:$0x7]
          %v452 = vstv %s450
          %v453 = vmul.f32 %v452, %v451
          %455 = vrot.lane.b32.xlu0 %v453, 112
          %v456 = vpop.permute.xlu0 %455
          %v457 = vrot.slane %v456, 1
          %vm458 = vcmask 916480
          %v459 = vsel %vm458, %v456, %v457
          %v461 = vadd.f32 %v436, %v459
          %s462 = sld [smem:[#allocation10 + $0x3f]]
          %v463 = vstv %s462
          %v464 = vmul.f32 %v463, %v451
          %466 = vrot.lane.b32.xlu0 %v464, 112
          %v467 = vpop.permute.xlu0 %466
          %v468 = vrot.slane %v467, 1
          %v469 = vsel %vm458, %v467, %v468
          %v471 = vadd.f32 %v449, %v469
          %s472 = sld [smem:[#allocation10 + $0x46]]
          %v473 = vstv %s472
          %v474 = vmul.f32 %v473, %v451
          %476 = vrot.lane.b32.xlu0 %v474, 80
          %v477 = vpop.permute.xlu0 %476
          %v478 = vrot.slane %v477, 1
          %vm479 = vcmask 654336
          %v480 = vsel %vm479, %v477, %v478
          %v482 = vadd.f32 %v461, %v480
          %s483 = sld [smem:[#allocation10 + $0x4d]]
          %v484 = vstv %s483
          %v485 = vmul.f32 %v484, %v451
          %487 = vrot.lane.b32.xlu0 %v485, 80
          %v488 = vpop.permute.xlu0 %487
          %v489 = vrot.slane %v488, 1
          %v490 = vsel %vm479, %v488, %v489
          %v492 = vadd.f32 %v471, %v490
          %s493 = sld [smem:[#allocation10 + $0x54]]
          %v494 = vstv %s493
          %v495 = vmul.f32 %v494, %v451
          %497 = vrot.lane.b32.xlu0 %v495, 48
          %v498 = vpop.permute.xlu0 %497
          %v499 = vrot.slane %v498, 1
          %vm500 = vcmask 392192
          %v501 = vsel %vm500, %v498, %v499
          %v503 = vadd.f32 %v482, %v501
          %s504 = sld [smem:[#allocation10 + $0x5b]]
          %v505 = vstv %s504
          %v506 = vmul.f32 %v505, %v451
          %508 = vrot.lane.b32.xlu0 %v506, 48
          %v509 = vpop.permute.xlu0 %508
          %v510 = vrot.slane %v509, 1
          %v511 = vsel %vm500, %v509, %v510
          %v513 = vadd.f32 %v492, %v511
          %vm514 = vcmp.ge.s32.totalorder %v308, 2
          %vm515 = vcmp.ge.s32.totalorder %v309, 2
          %vm516 = vcmp.ge.s32.totalorder %v310, 2
          %vm517 = vcmp.lt.s32.totalorder %v308, 18
          %vm518 = vcmp.lt.s32.totalorder %v309, 18
          %vm519 = vcmp.lt.s32.totalorder %v310, 18
          %vm520 = vmand %vm514, %vm517
          %vm521 = vmand %vm515, %vm518
          %vm522 = vmand %vm516, %vm519
          %v523 = vld [vmem:[#allocation4] sm:$0x3f]
          %v524 = vsel %vm520, 1, 0
          %v525 = vsel %vm521, 1, 0
          %v526 = vsel %vm522, 1, 0
          %vm527 = vcmp.eq.s32.totalorder %v524, 1
          %vm528 = vcmp.eq.s32.totalorder %v525, 1
          %vm529 = vcmp.eq.s32.totalorder %v526, 1
          %531 = vst [vmem:[#allocation1] ss:$4 sm:$0xff] %v523
          %v532 = vld.sshfl [vmem:[#allocation1] sm:$0xff pattern:$0x73625140]
          %v533 = vld.sshfl [vmem:[#allocation1 + $0x8] sm:$0xff pattern:$0x73625140]
          %v534 = vld.sshfl [vmem:[#allocation1 + $0x10] sm:$0xff pattern:$0x73625140]
          %535 = vrot.lane.b32.xlu0 %v532, 127
          %v536 = vpop.permute.xlu0 %535
          %537 = vrot.lane.b32.xlu0 %v533, 127
          %v538 = vpop.permute.xlu0 %537
          %539 = vrot.lane.b32.xlu0 %v534, 127
          %v540 = vpop.permute.xlu0 %539
          %vm541 = vcmask 1039360
          %v542 = vsel %vm541, %v536, %v538
          %v543 = vsel %vm541, %v538, %v540
          %v547 = vsel %vm527, %v542, 0.0
          %v548 = vsel %vm528, %v543, 0.0
          %v549 = vsel %vm529, %v540, 0.0
          %v553 = vrot.slane %v548, 6
          %v554 = vrot.slane %v549, 4
          %v555 = vsel %vm365, %v547, %v553
          %v556 = vsel %vm199, %v555, %v554
          %558 = vst.msk [vmem:[#allocation5] sm:$0x3f] %vm372, %v556
          %s559 = sld [smem:[#allocation10 + $0x1]]
          %v560 = vld [vmem:[#allocation5] ss:$2 sm:$0x3]
          %v561 = vstv %s559
          %v562 = vmul.f32 %v561, %v560
          %564 = vrot.lane.b32.xlu0 %v562, 16
          %v565 = vpop.permute.xlu0 %564
          %v566 = vrot.slane %v565, 7
          %v567 = vsel %vm446, %v566, %v565
          %v569 = vadd.f32 %v513, %v567
          %s570 = sld [smem:[#allocation10 + $0x8]]
          %v571 = vld [vmem:[#allocation5] ss:$2 sm:$0x7]
          %v572 = vstv %s570
          %v573 = vmul.f32 %v572, %v571
          %575 = vrot.lane.b32.xlu0 %v573, 112
          %v576 = vpop.permute.xlu0 %575
          %v577 = vrot.slane %v576, 1
          %v578 = vsel %vm458, %v576, %v577
          %v580 = vadd.f32 %v503, %v578
          %s581 = sld [smem:[#allocation10 + $0xf]]
          %v582 = vstv %s581
          %v583 = vmul.f32 %v582, %v571
          %585 = vrot.lane.b32.xlu0 %v583, 112
          %v586 = vpop.permute.xlu0 %585
          %v587 = vrot.slane %v586, 1
          %v588 = vsel %vm458, %v586, %v587
          %v590 = vadd.f32 %v569, %v588
          %s591 = sld [smem:[#allocation10 + $0x16]]
          %v592 = vstv %s591
          %v593 = vmul.f32 %v592, %v571
          %595 = vrot.lane.b32.xlu0 %v593, 80
          %v596 = vpop.permute.xlu0 %595
          %v597 = vrot.slane %v596, 1
          %v598 = vsel %vm479, %v596, %v597
          %v600 = vadd.f32 %v580, %v598
          %s601 = sld [smem:[#allocation10 + $0x1d]]
          %v602 = vstv %s601
          %v603 = vmul.f32 %v602, %v571
          %605 = vrot.lane.b32.xlu0 %v603, 80
          %v606 = vpop.permute.xlu0 %605
          %v607 = vrot.slane %v606, 1
          %v608 = vsel %vm479, %v606, %v607
          %v610 = vadd.f32 %v590, %v608
          %s611 = sld [smem:[#allocation10 + $0x24]]
          %v612 = vstv %s611
          %v613 = vmul.f32 %v612, %v571
          %615 = vrot.lane.b32.xlu0 %v613, 48
          %v616 = vpop.permute.xlu0 %615
          %v617 = vrot.slane %v616, 1
          %v618 = vsel %vm500, %v616, %v617
          %v620 = vadd.f32 %v600, %v618
          %s621 = sld [smem:[#allocation10 + $0x2b]]
          %v622 = vstv %s621
          %v623 = vmul.f32 %v622, %v571
          %625 = vrot.lane.b32.xlu0 %v623, 48
          %v626 = vpop.permute.xlu0 %625
          %v627 = vrot.slane %v626, 1
          %v628 = vsel %vm500, %v626, %v627
          %v630 = vadd.f32 %v610, %v628
          %s631 = sld [smem:[#allocation10 + $0x32]]
          %v632 = vld [vmem:[%s438] ss:$2 sm:$0x3]
          %v633 = vstv %s631
          %v634 = vmul.f32 %v633, %v632
          %v635 = vadd.f32 %v620, %v634
          %s636 = sld [smem:[#allocation10 + $0x39]]
          %v637 = vld [vmem:[%s438] ss:$2 sm:$0x7]
          %v638 = vstv %s636
          %v639 = vmul.f32 %v638, %v637
          %v640 = vadd.f32 %v630, %v639
          %s641 = sld [smem:[#allocation10 + $0x40]]
          %v642 = vstv %s641
          %v643 = vmul.f32 %v642, %v637
          %645 = vrot.lane.b32.xlu0 %v643, 96
          %v646 = vpop.permute.xlu0 %645
          %v647 = vrot.slane %v646, 1
          %v648 = vsel %vm391, %v646, %v647
          %v650 = vadd.f32 %v635, %v648
          %s651 = sld [smem:[#allocation10 + $0x47]]
          %v652 = vstv %s651
          %v653 = vmul.f32 %v652, %v637
          %655 = vrot.lane.b32.xlu0 %v653, 96
          %v656 = vpop.permute.xlu0 %655
          %v657 = vrot.slane %v656, 1
          %v658 = vsel %vm391, %v656, %v657
          %v660 = vadd.f32 %v640, %v658
          %s661 = sld [smem:[#allocation10 + $0x4e]]
          %v662 = vstv %s661
          %v663 = vmul.f32 %v662, %v637
          %665 = vrot.lane.b32.xlu0 %v663, 64
          %v666 = vpop.permute.xlu0 %665
          %v667 = vrot.slane %v666, 1
          %v668 = vsel %vm412, %v666, %v667
          %v670 = vadd.f32 %v650, %v668
          %s671 = sld [smem:[#allocation10 + $0x55]]
          %v672 = vstv %s671
          %v673 = vmul.f32 %v672, %v637
          %675 = vrot.lane.b32.xlu0 %v673, 64
          %v676 = vpop.permute.xlu0 %675
          %v677 = vrot.slane %v676, 1
          %v678 = vsel %vm412, %v676, %v677
          %v680 = vadd.f32 %v660, %v678
          %s681 = sld [smem:[#allocation10 + $0x5c]]
          %v682 = vstv %s681
          %v683 = vmul.f32 %v682, %v637
          %685 = vrot.lane.b32.xlu0 %v683, 32
          %v686 = vpop.permute.xlu0 %685
          %v687 = vrot.slane %v686, 1
          %v688 = vsel %vm433, %v686, %v687
          %v690 = vadd.f32 %v670, %v688
          %vm691 = vcmp.ge.s32.totalorder %v308, 1
          %vm692 = vcmp.ge.s32.totalorder %v309, 1
          %vm693 = vcmp.ge.s32.totalorder %v310, 1
          %vm694 = vcmp.lt.s32.totalorder %v308, 17
          %vm695 = vcmp.lt.s32.totalorder %v309, 17
          %vm696 = vcmp.lt.s32.totalorder %v310, 17
          %vm697 = vmand %vm691, %vm694
          %vm698 = vmand %vm692, %vm695
          %vm699 = vmand %vm693, %vm696
          %v700 = vld [vmem:[#allocation4] sm:$0x3f]
          %v701 = vsel %vm697, 1, 0
          %v702 = vsel %vm698, 1, 0
          %v703 = vsel %vm699, 1, 0
          %vm704 = vcmp.eq.s32.totalorder %v701, 1
          %vm705 = vcmp.eq.s32.totalorder %v702, 1
          %vm706 = vcmp.eq.s32.totalorder %v703, 1
          %708 = vst [vmem:[#allocation1] ss:$4 sm:$0xff] %v700
          %v709 = vld.sshfl [vmem:[#allocation1] sm:$0xff pattern:$0x73625140]
          %v710 = vld.sshfl [vmem:[#allocation1 + $0x8] sm:$0xff pattern:$0x73625140]
          %v711 = vld.sshfl [vmem:[#allocation1 + $0x10] sm:$0xff pattern:$0x73625140]
          %712 = vrot.lane.b32.xlu0 %v709, 126
          %v713 = vpop.permute.xlu0 %712
          %714 = vrot.lane.b32.xlu0 %v710, 126
          %v715 = vpop.permute.xlu0 %714
          %716 = vrot.lane.b32.xlu0 %v711, 126
          %v717 = vpop.permute.xlu0 %716
          %vm718 = vcmask 1031168
          %v719 = vsel %vm718, %v713, %v715
          %v720 = vsel %vm718, %v715, %v717
          %v724 = vsel %vm704, %v719, 0.0
          %v725 = vsel %vm705, %v720, 0.0
          %v726 = vsel %vm706, %v717, 0.0
          %v730 = vrot.slane %v725, 6
          %v731 = vrot.slane %v726, 4
          %v732 = vsel %vm365, %v724, %v730
          %v733 = vsel %vm199, %v732, %v731
          %735 = vst.msk [vmem:[#allocation5] sm:$0x3f] %vm372, %v733
          %s736 = sld [smem:[#allocation10 + $0x2]]
          %v737 = vld [vmem:[#allocation5] ss:$2 sm:$0x3]
          %v738 = vstv %s736
          %v739 = vmul.f32 %v738, %v737
          %v740 = vadd.f32 %v690, %v739
          %s741 = sld [smem:[#allocation10 + $0x9]]
          %v742 = vld [vmem:[#allocation5] ss:$2 sm:$0x7]
          %v743 = vstv %s741
          %v744 = vmul.f32 %v743, %v742
          %v745 = vadd.f32 %v680, %v744
          %s746 = sld [smem:[#allocation10 + $0x10]]
          %v747 = vstv %s746
          %v748 = vmul.f32 %v747, %v742
          %750 = vrot.lane.b32.xlu0 %v748, 96
          %v751 = vpop.permute.xlu0 %750
          %v752 = vrot.slane %v751, 1
          %v753 = vsel %vm391, %v751, %v752
          %v755 = vadd.f32 %v740, %v753
          %s756 = sld [smem:[#allocation10 + $0x17]]
          %v757 = vstv %s756
          %v758 = vmul.f32 %v757, %v742
          %760 = vrot.lane.b32.xlu0 %v758, 96
          %v761 = vpop.permute.xlu0 %760
          %v762 = vrot.slane %v761, 1
          %v763 = vsel %vm391, %v761, %v762
          %v765 = vadd.f32 %v745, %v763
          %s766 = sld [smem:[#allocation10 + $0x1e]]
          %v767 = vstv %s766
          %v768 = vmul.f32 %v767, %v742
          %770 = vrot.lane.b32.xlu0 %v768, 64
          %v771 = vpop.permute.xlu0 %770
          %v772 = vrot.slane %v771, 1
          %v773 = vsel %vm412, %v771, %v772
          %v775 = vadd.f32 %v755, %v773
          %s776 = sld [smem:[#allocation10 + $0x25]]
          %v777 = vstv %s776
          %v778 = vmul.f32 %v777, %v742
          %780 = vrot.lane.b32.xlu0 %v778, 64
          %v781 = vpop.permute.xlu0 %780
          %v782 = vrot.slane %v781, 1
          %v783 = vsel %vm412, %v781, %v782
          %v785 = vadd.f32 %v765, %v783
          %s786 = sld [smem:[#allocation10 + $0x2c]]
          %v787 = vstv %s786
          %v788 = vmul.f32 %v787, %v742
          %790 = vrot.lane.b32.xlu0 %v788, 32
          %v791 = vpop.permute.xlu0 %790
          %v792 = vrot.slane %v791, 1
          %v793 = vsel %vm433, %v791, %v792
          %v795 = vadd.f32 %v775, %v793
          %s796 = sld [smem:[#allocation10 + $0x33]]
          %v797 = vld [vmem:[%s438] ss:$2 sm:$0x3]
          %v798 = vstv %s796
          %v799 = vmul.f32 %v798, %v797
          %801 = vrot.lane.b32.xlu0 %v799, 16
          %v802 = vpop.permute.xlu0 %801
          %v803 = vrot.slane %v802, 7
          %v804 = vsel %vm446, %v803, %v802
          %v806 = vadd.f32 %v785, %v804
          %s807 = sld [smem:[#allocation10 + $0x3a]]
          %v808 = vld [vmem:[%s438] ss:$2 sm:$0x7]
          %v809 = vstv %s807
          %v810 = vmul.f32 %v809, %v808
          %812 = vrot.lane.b32.xlu0 %v810, 112
          %v813 = vpop.permute.xlu0 %812
          %v814 = vrot.slane %v813, 1
          %v815 = vsel %vm458, %v813, %v814
          %v817 = vadd.f32 %v795, %v815
          %s818 = sld [smem:[#allocation10 + $0x41]]
          %v819 = vstv %s818
          %v820 = vmul.f32 %v819, %v808
          %822 = vrot.lane.b32.xlu0 %v820, 112
          %v823 = vpop.permute.xlu0 %822
          %v824 = vrot.slane %v823, 1
          %v825 = vsel %vm458, %v823, %v824
          %v827 = vadd.f32 %v806, %v825
          %s828 = sld [smem:[#allocation10 + $0x48]]
          %v829 = vstv %s828
          %v830 = vmul.f32 %v829, %v808
          %832 = vrot.lane.b32.xlu0 %v830, 80
          %v833 = vpop.permute.xlu0 %832
          %v834 = vrot.slane %v833, 1
          %v835 = vsel %vm479, %v833, %v834
          %v837 = vadd.f32 %v817, %v835
          %s838 = sld [smem:[#allocation10 + $0x4f]]
          %v839 = vstv %s838
          %v840 = vmul.f32 %v839, %v808
          %842 = vrot.lane.b32.xlu0 %v840, 80
          %v843 = vpop.permute.xlu0 %842
          %v844 = vrot.slane %v843, 1
          %v845 = vsel %vm479, %v843, %v844
          %v847 = vadd.f32 %v827, %v845
          %s848 = sld [smem:[#allocation10 + $0x56]]
          %v849 = vstv %s848
          %v850 = vmul.f32 %v849, %v808
          %852 = vrot.lane.b32.xlu0 %v850, 48
          %v853 = vpop.permute.xlu0 %852
          %v854 = vrot.slane %v853, 1
          %v855 = vsel %vm500, %v853, %v854
          %v857 = vadd.f32 %v837, %v855
          %s858 = sld [smem:[#allocation10 + $0x5d]]
          %v859 = vstv %s858
          %v860 = vmul.f32 %v859, %v808
          %862 = vrot.lane.b32.xlu0 %v860, 48
          %v863 = vpop.permute.xlu0 %862
          %v864 = vrot.slane %v863, 1
          %v865 = vsel %vm500, %v863, %v864
          %v867 = vadd.f32 %v847, %v865
          %vm868 = vcmp.ge.s32.totalorder %v308, 0
          %vm869 = vcmp.ge.s32.totalorder %v309, 0
          %vm870 = vcmp.ge.s32.totalorder %v310, 0
          %vm871 = vcmp.lt.s32.totalorder %v308, 16
          %vm872 = vcmp.lt.s32.totalorder %v309, 16
          %vm873 = vcmp.lt.s32.totalorder %v310, 16
          %vm874 = vmand %vm868, %vm871
          %vm875 = vmand %vm869, %vm872
          %vm876 = vmand %vm870, %vm873
          %v877 = vld [vmem:[#allocation4] sm:$0x3f]
          %v878 = vsel %vm874, 1, 0
          %v879 = vsel %vm875, 1, 0
          %v880 = vsel %vm876, 1, 0
          %vm881 = vcmp.eq.s32.totalorder %v878, 1
          %vm882 = vcmp.eq.s32.totalorder %v879, 1
          %vm883 = vcmp.eq.s32.totalorder %v880, 1
          %885 = vst [vmem:[#allocation1] ss:$4 sm:$0xff] %v877
          %v886 = vld.sshfl [vmem:[#allocation1] sm:$0xff pattern:$0x73625140]
          %v887 = vld.sshfl [vmem:[#allocation1 + $0x8] sm:$0xff pattern:$0x73625140]
          %v888 = vld.sshfl [vmem:[#allocation1 + $0x10] sm:$0xff pattern:$0x73625140]
          %889 = vrot.lane.b32.xlu0 %v886, 125
          %v890 = vpop.permute.xlu0 %889
          %891 = vrot.lane.b32.xlu0 %v887, 125
          %v892 = vpop.permute.xlu0 %891
          %893 = vrot.lane.b32.xlu0 %v888, 125
          %v894 = vpop.permute.xlu0 %893
          %vm895 = vcmask 1022976
          %v896 = vsel %vm895, %v890, %v892
          %v897 = vsel %vm895, %v892, %v894
          %v901 = vsel %vm881, %v896, 0.0
          %v902 = vsel %vm882, %v897, 0.0
          %v903 = vsel %vm883, %v894, 0.0
          %v907 = vrot.slane %v902, 6
          %v908 = vrot.slane %v903, 4
          %v909 = vsel %vm365, %v901, %v907
          %v910 = vsel %vm199, %v909, %v908
          %912 = vst.msk [vmem:[#allocation5] sm:$0x3f] %vm372, %v910
          %s913 = sld [smem:[#allocation10 + $0x3]]
          %v914 = vld [vmem:[#allocation5] ss:$2 sm:$0x3]
          %v915 = vstv %s913
          %v916 = vmul.f32 %v915, %v914
          %918 = vrot.lane.b32.xlu0 %v916, 16
          %v919 = vpop.permute.xlu0 %918
          %v920 = vrot.slane %v919, 7
          %v921 = vsel %vm446, %v920, %v919
          %v923 = vadd.f32 %v867, %v921
          %s924 = sld [smem:[#allocation10 + $0xa]]
          %v925 = vld [vmem:[#allocation5] ss:$2 sm:$0x7]
          %v926 = vstv %s924
          %v927 = vmul.f32 %v926, %v925
          %929 = vrot.lane.b32.xlu0 %v927, 112
          %v930 = vpop.permute.xlu0 %929
          %v931 = vrot.slane %v930, 1
          %v932 = vsel %vm458, %v930, %v931
          %v934 = vadd.f32 %v857, %v932
          %s935 = sld [smem:[#allocation10 + $0x11]]
          %v936 = vstv %s935
          %v937 = vmul.f32 %v936, %v925
          %939 = vrot.lane.b32.xlu0 %v937, 112
          %v940 = vpop.permute.xlu0 %939
          %v941 = vrot.slane %v940, 1
          %v942 = vsel %vm458, %v940, %v941
          %v944 = vadd.f32 %v923, %v942
          %s945 = sld [smem:[#allocation10 + $0x18]]
          %v946 = vstv %s945
          %v947 = vmul.f32 %v946, %v925
          %949 = vrot.lane.b32.xlu0 %v947, 80
          %v950 = vpop.permute.xlu0 %949
          %v951 = vrot.slane %v950, 1
          %v952 = vsel %vm479, %v950, %v951
          %v954 = vadd.f32 %v934, %v952
          %s955 = sld [smem:[#allocation10 + $0x1f]]
          %v956 = vstv %s955
          %v957 = vmul.f32 %v956, %v925
          %959 = vrot.lane.b32.xlu0 %v957, 80
          %v960 = vpop.permute.xlu0 %959
          %v961 = vrot.slane %v960, 1
          %v962 = vsel %vm479, %v960, %v961
          %v964 = vadd.f32 %v944, %v962
          %s965 = sld [smem:[#allocation10 + $0x26]]
          %v966 = vstv %s965
          %v967 = vmul.f32 %v966, %v925
          %969 = vrot.lane.b32.xlu0 %v967, 48
          %v970 = vpop.permute.xlu0 %969
          %v971 = vrot.slane %v970, 1
          %v972 = vsel %vm500, %v970, %v971
          %v974 = vadd.f32 %v954, %v972
          %s975 = sld [smem:[#allocation10 + $0x2d]]
          %v976 = vstv %s975
          %v977 = vmul.f32 %v976, %v925
          %979 = vrot.lane.b32.xlu0 %v977, 48
          %v980 = vpop.permute.xlu0 %979
          %v981 = vrot.slane %v980, 1
          %v982 = vsel %vm500, %v980, %v981
          %v984 = vadd.f32 %v964, %v982
          %s985 = sld [smem:[#allocation10 + $0x34]]
          %v986 = vld [vmem:[%s438] ss:$2 sm:$0x3]
          %v987 = vstv %s985
          %v988 = vmul.f32 %v987, %v986
          %v989 = vadd.f32 %v974, %v988
          %s990 = sld [smem:[#allocation10 + $0x3b]]
          %v991 = vld [vmem:[%s438] ss:$2 sm:$0x7]
          %v992 = vstv %s990
          %v993 = vmul.f32 %v992, %v991
          %v994 = vadd.f32 %v984, %v993
          %s995 = sld [smem:[#allocation10 + $0x42]]
          %v996 = vstv %s995
          %v997 = vmul.f32 %v996, %v991
          %999 = vrot.lane.b32.xlu0 %v997, 96
          %v1000 = vpop.permute.xlu0 %999
          %v1001 = vrot.slane %v1000, 1
          %v1002 = vsel %vm391, %v1000, %v1001
          %v1004 = vadd.f32 %v989, %v1002
          %s1005 = sld [smem:[#allocation10 + $0x49]]
          %v1006 = vstv %s1005
          %v1007 = vmul.f32 %v1006, %v991
          %1009 = vrot.lane.b32.xlu0 %v1007, 96
          %v1010 = vpop.permute.xlu0 %1009
          %v1011 = vrot.slane %v1010, 1
          %v1012 = vsel %vm391, %v1010, %v1011
          %v1014 = vadd.f32 %v994, %v1012
          %s1015 = sld [smem:[#allocation10 + $0x50]]
          %v1016 = vstv %s1015
          %v1017 = vmul.f32 %v1016, %v991
          %1019 = vrot.lane.b32.xlu0 %v1017, 64
          %v1020 = vpop.permute.xlu0 %1019
          %v1021 = vrot.slane %v1020, 1
          %v1022 = vsel %vm412, %v1020, %v1021
          %v1024 = vadd.f32 %v1004, %v1022
          %s1025 = sld [smem:[#allocation10 + $0x57]]
          %v1026 = vstv %s1025
          %v1027 = vmul.f32 %v1026, %v991
          %1029 = vrot.lane.b32.xlu0 %v1027, 64
          %v1030 = vpop.permute.xlu0 %1029
          %v1031 = vrot.slane %v1030, 1
          %v1032 = vsel %vm412, %v1030, %v1031
          %v1034 = vadd.f32 %v1014, %v1032
          %s1035 = sld [smem:[#allocation10 + $0x5e]]
          %v1036 = vstv %s1035
          %v1037 = vmul.f32 %v1036, %v991
          %1039 = vrot.lane.b32.xlu0 %v1037, 32
          %v1040 = vpop.permute.xlu0 %1039
          %v1041 = vrot.slane %v1040, 1
          %v1042 = vsel %vm433, %v1040, %v1041
          %v1044 = vadd.f32 %v1024, %v1042
          %vm1045 = vcmp.ge.s32.totalorder %v308, 4294967295
          %vm1046 = vcmp.ge.s32.totalorder %v309, 4294967295
          %vm1047 = vcmp.ge.s32.totalorder %v310, 4294967295
          %vm1048 = vcmp.lt.s32.totalorder %v308, 15
          %vm1049 = vcmp.lt.s32.totalorder %v309, 15
          %vm1050 = vcmp.lt.s32.totalorder %v310, 15
          %vm1051 = vmand %vm1045, %vm1048
          %vm1052 = vmand %vm1046, %vm1049
          %vm1053 = vmand %vm1047, %vm1050
          %v1054 = vld [vmem:[#allocation4] sm:$0x3f]
          %v1055 = vsel %vm1051, 1, 0
          %v1056 = vsel %vm1052, 1, 0
          %v1057 = vsel %vm1053, 1, 0
          %vm1058 = vcmp.eq.s32.totalorder %v1055, 1
          %vm1059 = vcmp.eq.s32.totalorder %v1056, 1
          %vm1060 = vcmp.eq.s32.totalorder %v1057, 1
          %1062 = vst [vmem:[#allocation1] ss:$4 sm:$0xff] %v1054
          %v1063 = vld.sshfl [vmem:[#allocation1] sm:$0xff pattern:$0x73625140]
          %v1064 = vld.sshfl [vmem:[#allocation1 + $0x8] sm:$0xff pattern:$0x73625140]
          %v1065 = vld.sshfl [vmem:[#allocation1 + $0x10] sm:$0xff pattern:$0x73625140]
          %1066 = vrot.lane.b32.xlu0 %v1063, 124
          %v1067 = vpop.permute.xlu0 %1066
          %1068 = vrot.lane.b32.xlu0 %v1064, 124
          %v1069 = vpop.permute.xlu0 %1068
          %1070 = vrot.lane.b32.xlu0 %v1065, 124
          %v1071 = vpop.permute.xlu0 %1070
          %vm1072 = vcmask 1014784
          %v1073 = vsel %vm1072, %v1067, %v1069
          %v1074 = vsel %vm1072, %v1069, %v1071
          %v1078 = vsel %vm1058, %v1073, 0.0
          %v1079 = vsel %vm1059, %v1074, 0.0
          %v1080 = vsel %vm1060, %v1071, 0.0
          %v1084 = vrot.slane %v1079, 6
          %v1085 = vrot.slane %v1080, 4
          %v1086 = vsel %vm365, %v1078, %v1084
          %v1087 = vsel %vm199, %v1086, %v1085
          %1089 = vst.msk [vmem:[#allocation5] sm:$0x3f] %vm372, %v1087
          %s1090 = sld [smem:[#allocation10 + $0x4]]
          %v1091 = vld [vmem:[#allocation5] ss:$2 sm:$0x3]
          %v1092 = vstv %s1090
          %v1093 = vmul.f32 %v1092, %v1091
          %v1094 = vadd.f32 %v1044, %v1093
          %s1095 = sld [smem:[#allocation10 + $0xb]]
          %v1096 = vld [vmem:[#allocation5] ss:$2 sm:$0x7]
          %v1097 = vstv %s1095
          %v1098 = vmul.f32 %v1097, %v1096
          %v1099 = vadd.f32 %v1034, %v1098
          %s1100 = sld [smem:[#allocation10 + $0x12]]
          %v1101 = vstv %s1100
          %v1102 = vmul.f32 %v1101, %v1096
          %1104 = vrot.lane.b32.xlu0 %v1102, 96
          %v1105 = vpop.permute.xlu0 %1104
          %v1106 = vrot.slane %v1105, 1
          %v1107 = vsel %vm391, %v1105, %v1106
          %v1109 = vadd.f32 %v1094, %v1107
          %s1110 = sld [smem:[#allocation10 + $0x19]]
          %v1111 = vstv %s1110
          %v1112 = vmul.f32 %v1111, %v1096
          %1114 = vrot.lane.b32.xlu0 %v1112, 96
          %v1115 = vpop.permute.xlu0 %1114
          %v1116 = vrot.slane %v1115, 1
          %v1117 = vsel %vm391, %v1115, %v1116
          %v1119 = vadd.f32 %v1099, %v1117
          %s1120 = sld [smem:[#allocation10 + $0x20]]
          %v1121 = vstv %s1120
          %v1122 = vmul.f32 %v1121, %v1096
          %1124 = vrot.lane.b32.xlu0 %v1122, 64
          %v1125 = vpop.permute.xlu0 %1124
          %v1126 = vrot.slane %v1125, 1
          %v1127 = vsel %vm412, %v1125, %v1126
          %v1129 = vadd.f32 %v1109, %v1127
          %s1130 = sld [smem:[#allocation10 + $0x27]]
          %v1131 = vstv %s1130
          %v1132 = vmul.f32 %v1131, %v1096
          %1134 = vrot.lane.b32.xlu0 %v1132, 64
          %v1135 = vpop.permute.xlu0 %1134
          %v1136 = vrot.slane %v1135, 1
          %v1137 = vsel %vm412, %v1135, %v1136
          %v1139 = vadd.f32 %v1119, %v1137
          %s1140 = sld [smem:[#allocation10 + $0x2e]]
          %v1141 = vstv %s1140
          %v1142 = vmul.f32 %v1141, %v1096
          %1144 = vrot.lane.b32.xlu0 %v1142, 32
          %v1145 = vpop.permute.xlu0 %1144
          %v1146 = vrot.slane %v1145, 1
          %v1147 = vsel %vm433, %v1145, %v1146
          %v1149 = vadd.f32 %v1129, %v1147
          %s1150 = sld [smem:[#allocation10 + $0x35]]
          %v1151 = vld [vmem:[%s438] ss:$2 sm:$0x3]
          %v1152 = vstv %s1150
          %v1153 = vmul.f32 %v1152, %v1151
          %1155 = vrot.lane.b32.xlu0 %v1153, 16
          %v1156 = vpop.permute.xlu0 %1155
          %v1157 = vrot.slane %v1156, 7
          %v1158 = vsel %vm446, %v1157, %v1156
          %v1160 = vadd.f32 %v1139, %v1158
          %s1161 = sld [smem:[#allocation10 + $0x3c]]
          %v1162 = vld [vmem:[%s438] ss:$2 sm:$0x7]
          %v1163 = vstv %s1161
          %v1164 = vmul.f32 %v1163, %v1162
          %1166 = vrot.lane.b32.xlu0 %v1164, 112
          %v1167 = vpop.permute.xlu0 %1166
          %v1168 = vrot.slane %v1167, 1
          %v1169 = vsel %vm458, %v1167, %v1168
          %v1171 = vadd.f32 %v1149, %v1169
          %s1172 = sld [smem:[#allocation10 + $0x43]]
          %v1173 = vstv %s1172
          %v1174 = vmul.f32 %v1173, %v1162
          %1176 = vrot.lane.b32.xlu0 %v1174, 112
          %v1177 = vpop.permute.xlu0 %1176
          %v1178 = vrot.slane %v1177, 1
          %v1179 = vsel %vm458, %v1177, %v1178
          %v1181 = vadd.f32 %v1160, %v1179
          %s1182 = sld [smem:[#allocation10 + $0x4a]]
          %v1183 = vstv %s1182
          %v1184 = vmul.f32 %v1183, %v1162
          %1186 = vrot.lane.b32.xlu0 %v1184, 80
          %v1187 = vpop.permute.xlu0 %1186
          %v1188 = vrot.slane %v1187, 1
          %v1189 = vsel %vm479, %v1187, %v1188
          %v1191 = vadd.f32 %v1171, %v1189
          %s1192 = sld [smem:[#allocation10 + $0x51]]
          %v1193 = vstv %s1192
          %v1194 = vmul.f32 %v1193, %v1162
          %1196 = vrot.lane.b32.xlu0 %v1194, 80
          %v1197 = vpop.permute.xlu0 %1196
          %v1198 = vrot.slane %v1197, 1
          %v1199 = vsel %vm479, %v1197, %v1198
          %v1201 = vadd.f32 %v1181, %v1199
          %s1202 = sld [smem:[#allocation10 + $0x58]]
          %v1203 = vstv %s1202
          %v1204 = vmul.f32 %v1203, %v1162
          %1206 = vrot.lane.b32.xlu0 %v1204, 48
          %v1207 = vpop.permute.xlu0 %1206
          %v1208 = vrot.slane %v1207, 1
          %v1209 = vsel %vm500, %v1207, %v1208
          %v1211 = vadd.f32 %v1191, %v1209
          %s1212 = sld [smem:[#allocation10 + $0x5f]]
          %v1213 = vstv %s1212
          %v1214 = vmul.f32 %v1213, %v1162
          %1216 = vrot.lane.b32.xlu0 %v1214, 48
          %v1217 = vpop.permute.xlu0 %1216
          %v1218 = vrot.slane %v1217, 1
          %v1219 = vsel %vm500, %v1217, %v1218
          %v1221 = vadd.f32 %v1201, %v1219
          %vm1222 = vcmp.ge.s32.totalorder %v308, 4294967294
          %vm1223 = vcmp.ge.s32.totalorder %v309, 4294967294
          %vm1224 = vcmp.ge.s32.totalorder %v310, 4294967294
          %vm1225 = vcmp.lt.s32.totalorder %v308, 14
          %vm1226 = vcmp.lt.s32.totalorder %v309, 14
          %vm1227 = vcmp.lt.s32.totalorder %v310, 14
          %vm1228 = vmand %vm1222, %vm1225
          %vm1229 = vmand %vm1223, %vm1226
          %vm1230 = vmand %vm1224, %vm1227
          %v1231 = vld [vmem:[#allocation4] sm:$0x3f]
          %v1232 = vsel %vm1228, 1, 0
          %v1233 = vsel %vm1229, 1, 0
          %v1234 = vsel %vm1230, 1, 0
          %vm1235 = vcmp.eq.s32.totalorder %v1232, 1
          %vm1236 = vcmp.eq.s32.totalorder %v1233, 1
          %vm1237 = vcmp.eq.s32.totalorder %v1234, 1
          %1239 = vst [vmem:[#allocation1] ss:$4 sm:$0xff] %v1231
          %v1240 = vld.sshfl [vmem:[#allocation1] sm:$0xff pattern:$0x73625140]
          %v1241 = vld.sshfl [vmem:[#allocation1 + $0x8] sm:$0xff pattern:$0x73625140]
          %v1242 = vld.sshfl [vmem:[#allocation1 + $0x10] sm:$0xff pattern:$0x73625140]
          %1243 = vrot.lane.b32.xlu0 %v1240, 123
          %v1244 = vpop.permute.xlu0 %1243
          %1245 = vrot.lane.b32.xlu0 %v1241, 123
          %v1246 = vpop.permute.xlu0 %1245
          %1247 = vrot.lane.b32.xlu0 %v1242, 123
          %v1248 = vpop.permute.xlu0 %1247
          %vm1249 = vcmask 1006592
          %v1250 = vsel %vm1249, %v1244, %v1246
          %v1251 = vsel %vm1249, %v1246, %v1248
          %v1255 = vsel %vm1235, %v1250, 0.0
          %v1256 = vsel %vm1236, %v1251, 0.0
          %v1257 = vsel %vm1237, %v1248, 0.0
          %v1261 = vrot.slane %v1256, 6
          %v1262 = vrot.slane %v1257, 4
          %v1263 = vsel %vm365, %v1255, %v1261
          %v1264 = vsel %vm199, %v1263, %v1262
          %1266 = vst.msk [vmem:[#allocation5] sm:$0x3f] %vm372, %v1264
          %s1267 = sld [smem:[#allocation10 + $0x5]]
          %v1268 = vld [vmem:[#allocation5] ss:$2 sm:$0x3]
          %v1269 = vstv %s1267
          %v1270 = vmul.f32 %v1269, %v1268
          %1272 = vrot.lane.b32.xlu0 %v1270, 16
          %v1273 = vpop.permute.xlu0 %1272
          %v1274 = vrot.slane %v1273, 7
          %v1275 = vsel %vm446, %v1274, %v1273
          %v1277 = vadd.f32 %v1221, %v1275
          %s1278 = sld [smem:[#allocation10 + $0xc]]
          %v1279 = vld [vmem:[#allocation5] ss:$2 sm:$0x7]
          %v1280 = vstv %s1278
          %v1281 = vmul.f32 %v1280, %v1279
          %1283 = vrot.lane.b32.xlu0 %v1281, 112
          %v1284 = vpop.permute.xlu0 %1283
          %v1285 = vrot.slane %v1284, 1
          %v1286 = vsel %vm458, %v1284, %v1285
          %v1288 = vadd.f32 %v1211, %v1286
          %s1289 = sld [smem:[#allocation10 + $0x13]]
          %v1290 = vstv %s1289
          %v1291 = vmul.f32 %v1290, %v1279
          %1293 = vrot.lane.b32.xlu0 %v1291, 112
          %v1294 = vpop.permute.xlu0 %1293
          %v1295 = vrot.slane %v1294, 1
          %v1296 = vsel %vm458, %v1294, %v1295
          %v1298 = vadd.f32 %v1277, %v1296
          %s1299 = sld [smem:[#allocation10 + $0x1a]]
          %v1300 = vstv %s1299
          %v1301 = vmul.f32 %v1300, %v1279
          %1303 = vrot.lane.b32.xlu0 %v1301, 80
          %v1304 = vpop.permute.xlu0 %1303
          %v1305 = vrot.slane %v1304, 1
          %v1306 = vsel %vm479, %v1304, %v1305
          %v1308 = vadd.f32 %v1288, %v1306
          %s1309 = sld [smem:[#allocation10 + $0x21]]
          %v1310 = vstv %s1309
          %v1311 = vmul.f32 %v1310, %v1279
          %1313 = vrot.lane.b32.xlu0 %v1311, 80
          %v1314 = vpop.permute.xlu0 %1313
          %v1315 = vrot.slane %v1314, 1
          %v1316 = vsel %vm479, %v1314, %v1315
          %v1318 = vadd.f32 %v1298, %v1316
          %s1319 = sld [smem:[#allocation10 + $0x28]]
          %v1320 = vstv %s1319
          %v1321 = vmul.f32 %v1320, %v1279
          %1323 = vrot.lane.b32.xlu0 %v1321, 48
          %v1324 = vpop.permute.xlu0 %1323
          %v1325 = vrot.slane %v1324, 1
          %v1326 = vsel %vm500, %v1324, %v1325
          %v1328 = vadd.f32 %v1308, %v1326
          %s1329 = sld [smem:[#allocation10 + $0x2f]]
          %v1330 = vstv %s1329
          %v1331 = vmul.f32 %v1330, %v1279
          %1333 = vrot.lane.b32.xlu0 %v1331, 48
          %v1334 = vpop.permute.xlu0 %1333
          %v1335 = vrot.slane %v1334, 1
          %v1336 = vsel %vm500, %v1334, %v1335
          %v1338 = vadd.f32 %v1318, %v1336
          %s1339 = sld [smem:[#allocation10 + $0x36]]
          %v1340 = vld [vmem:[%s438] ss:$2 sm:$0x3]
          %v1341 = vstv %s1339
          %v1342 = vmul.f32 %v1341, %v1340
          %v1343 = vadd.f32 %v1328, %v1342
          %s1344 = sld [smem:[#allocation10 + $0x3d]]
          %v1345 = vld [vmem:[%s438] ss:$2 sm:$0x7]
          %v1346 = vstv %s1344
          %v1347 = vmul.f32 %v1346, %v1345
          %v1348 = vadd.f32 %v1338, %v1347
          %s1349 = sld [smem:[#allocation10 + $0x44]]
          %v1350 = vstv %s1349
          %v1351 = vmul.f32 %v1350, %v1345
          %1353 = vrot.lane.b32.xlu0 %v1351, 96
          %v1354 = vpop.permute.xlu0 %1353
          %v1355 = vrot.slane %v1354, 1
          %v1356 = vsel %vm391, %v1354, %v1355
          %v1358 = vadd.f32 %v1343, %v1356
          %s1359 = sld [smem:[#allocation10 + $0x4b]]
          %v1360 = vstv %s1359
          %v1361 = vmul.f32 %v1360, %v1345
          %1363 = vrot.lane.b32.xlu0 %v1361, 96
          %v1364 = vpop.permute.xlu0 %1363
          %v1365 = vrot.slane %v1364, 1
          %v1366 = vsel %vm391, %v1364, %v1365
          %v1368 = vadd.f32 %v1348, %v1366
          %s1369 = sld [smem:[#allocation10 + $0x52]]
          %v1370 = vstv %s1369
          %v1371 = vmul.f32 %v1370, %v1345
          %1373 = vrot.lane.b32.xlu0 %v1371, 64
          %v1374 = vpop.permute.xlu0 %1373
          %v1375 = vrot.slane %v1374, 1
          %v1376 = vsel %vm412, %v1374, %v1375
          %v1378 = vadd.f32 %v1358, %v1376
          %s1379 = sld [smem:[#allocation10 + $0x59]]
          %v1380 = vstv %s1379
          %v1381 = vmul.f32 %v1380, %v1345
          %1383 = vrot.lane.b32.xlu0 %v1381, 64
          %v1384 = vpop.permute.xlu0 %1383
          %v1385 = vrot.slane %v1384, 1
          %v1386 = vsel %vm412, %v1384, %v1385
          %v1388 = vadd.f32 %v1368, %v1386
          %s1389 = sld [smem:[#allocation10 + $0x60]]
          %v1390 = vstv %s1389
          %v1391 = vmul.f32 %v1390, %v1345
          %1393 = vrot.lane.b32.xlu0 %v1391, 32
          %v1394 = vpop.permute.xlu0 %1393
          %v1395 = vrot.slane %v1394, 1
          %v1396 = vsel %vm433, %v1394, %v1395
          %v1398 = vadd.f32 %v1378, %v1396
          %vm1399 = vcmp.ge.s32.totalorder %v308, 4294967293
          %vm1400 = vcmp.ge.s32.totalorder %v309, 4294967293
          %vm1401 = vcmp.ge.s32.totalorder %v310, 4294967293
          %vm1402 = vcmp.lt.s32.totalorder %v308, 13
          %vm1403 = vcmp.lt.s32.totalorder %v309, 13
          %vm1404 = vcmp.lt.s32.totalorder %v310, 13
          %vm1405 = vmand %vm1399, %vm1402
          %vm1406 = vmand %vm1400, %vm1403
          %vm1407 = vmand %vm1401, %vm1404
          %v1408 = vld [vmem:[#allocation4] sm:$0x3f]
          %v1409 = vsel %vm1405, 1, 0
          %v1410 = vsel %vm1406, 1, 0
          %v1411 = vsel %vm1407, 1, 0
          %vm1412 = vcmp.eq.s32.totalorder %v1409, 1
          %vm1413 = vcmp.eq.s32.totalorder %v1410, 1
          %vm1414 = vcmp.eq.s32.totalorder %v1411, 1
          %1416 = vst [vmem:[#allocation1] ss:$4 sm:$0xff] %v1408
          %v1417 = vld.sshfl [vmem:[#allocation1] sm:$0xff pattern:$0x73625140]
          %v1418 = vld.sshfl [vmem:[#allocation1 + $0x8] sm:$0xff pattern:$0x73625140]
          %v1419 = vld.sshfl [vmem:[#allocation1 + $0x10] sm:$0xff pattern:$0x73625140]
          %1420 = vrot.lane.b32.xlu0 %v1417, 122
          %v1421 = vpop.permute.xlu0 %1420
          %1422 = vrot.lane.b32.xlu0 %v1418, 122
          %v1423 = vpop.permute.xlu0 %1422
          %1424 = vrot.lane.b32.xlu0 %v1419, 122
          %v1425 = vpop.permute.xlu0 %1424
          %vm1426 = vcmask 998400
          %v1427 = vsel %vm1426, %v1421, %v1423
          %v1428 = vsel %vm1426, %v1423, %v1425
          %v1432 = vsel %vm1412, %v1427, 0.0
          %v1433 = vsel %vm1413, %v1428, 0.0
          %v1434 = vsel %vm1414, %v1425, 0.0
          %v1438 = vrot.slane %v1433, 6
          %v1439 = vrot.slane %v1434, 4
          %v1440 = vsel %vm365, %v1432, %v1438
          %v1441 = vsel %vm199, %v1440, %v1439
          %1443 = vst.msk [vmem:[#allocation5] sm:$0x3f] %vm372, %v1441
          %s1444 = sld [smem:[#allocation10 + $0x6]]
          %v1445 = vld [vmem:[#allocation5] ss:$2 sm:$0x3]
          %v1446 = vstv %s1444
          %v1447 = vmul.f32 %v1446, %v1445
          %v1448 = vadd.f32 %v1398, %v1447
          %s1449 = sld [smem:[#allocation10 + $0xd]]
          %v1450 = vld [vmem:[#allocation5] ss:$2 sm:$0x7]
          %v1451 = vstv %s1449
          %v1452 = vmul.f32 %v1451, %v1450
          %v1453 = vadd.f32 %v1388, %v1452
          %s1454 = sld [smem:[#allocation10 + $0x14]]
          %v1455 = vstv %s1454
          %v1456 = vmul.f32 %v1455, %v1450
          %1458 = vrot.lane.b32.xlu0 %v1456, 96
          %v1459 = vpop.permute.xlu0 %1458
          %v1460 = vrot.slane %v1459, 1
          %v1461 = vsel %vm391, %v1459, %v1460
          %v1463 = vadd.f32 %v1448, %v1461
          %s1464 = sld [smem:[#allocation10 + $0x1b]]
          %v1465 = vstv %s1464
          %v1466 = vmul.f32 %v1465, %v1450
          %1468 = vrot.lane.b32.xlu0 %v1466, 96
          %v1469 = vpop.permute.xlu0 %1468
          %v1470 = vrot.slane %v1469, 1
          %v1471 = vsel %vm391, %v1469, %v1470
          %v1473 = vadd.f32 %v1453, %v1471
          %s1474 = sld [smem:[#allocation10 + $0x22]]
          %v1475 = vstv %s1474
          %v1476 = vmul.f32 %v1475, %v1450
          %1478 = vrot.lane.b32.xlu0 %v1476, 64
          %v1479 = vpop.permute.xlu0 %1478
          %v1480 = vrot.slane %v1479, 1
          %v1481 = vsel %vm412, %v1479, %v1480
          %v1483 = vadd.f32 %v1463, %v1481
          %s1484 = sld [smem:[#allocation10 + $0x29]]
          %v1485 = vstv %s1484
          %v1486 = vmul.f32 %v1485, %v1450
          %1488 = vrot.lane.b32.xlu0 %v1486, 64
          %v1489 = vpop.permute.xlu0 %1488
          %v1490 = vrot.slane %v1489, 1
          %v1491 = vsel %vm412, %v1489, %v1490
          %v1493 = vadd.f32 %v1473, %v1491
          %s1494 = sld [smem:[#allocation10 + $0x30]]
          %v1495 = vstv %s1494
          %v1496 = vmul.f32 %v1495, %v1450
          %1498 = vrot.lane.b32.xlu0 %v1496, 32
          %v1499 = vpop.permute.xlu0 %1498
          %v1500 = vrot.slane %v1499, 1
          %v1501 = vsel %vm433, %v1499, %v1500
          %v1503 = vadd.f32 %v1483, %v1501
          %s1504 = sld [smem:[#allocation10 + $0x37]]
          %v1505 = vld [vmem:[%s438] ss:$2 sm:$0x3]
          %v1506 = vstv %s1504
          %v1507 = vmul.f32 %v1506, %v1505
          %1509 = vrot.lane.b32.xlu0 %v1507, 16
          %v1510 = vpop.permute.xlu0 %1509
          %v1511 = vrot.slane %v1510, 7
          %v1512 = vsel %vm446, %v1511, %v1510
          %v1514 = vadd.f32 %v1493, %v1512
          %s1515 = sld [smem:[#allocation10 + $0x3e]]
          %v1516 = vld [vmem:[%s438] ss:$2 sm:$0x7]
          %v1517 = vstv %s1515
          %v1518 = vmul.f32 %v1517, %v1516
          %1520 = vrot.lane.b32.xlu0 %v1518, 112
          %v1521 = vpop.permute.xlu0 %1520
          %v1522 = vrot.slane %v1521, 1
          %v1523 = vsel %vm458, %v1521, %v1522
          %v1525 = vadd.f32 %v1503, %v1523
          %s1526 = sld [smem:[#allocation10 + $0x45]]
          %v1527 = vstv %s1526
          %v1528 = vmul.f32 %v1527, %v1516
          %1530 = vrot.lane.b32.xlu0 %v1528, 112
          %v1531 = vpop.permute.xlu0 %1530
          %v1532 = vrot.slane %v1531, 1
          %v1533 = vsel %vm458, %v1531, %v1532
          %v1535 = vadd.f32 %v1514, %v1533
          %s1536 = sld [smem:[#allocation10 + $0x4c]]
          %v1537 = vstv %s1536
          %v1538 = vmul.f32 %v1537, %v1516
          %1540 = vrot.lane.b32.xlu0 %v1538, 80
          %v1541 = vpop.permute.xlu0 %1540
          %v1542 = vrot.slane %v1541, 1
          %v1543 = vsel %vm479, %v1541, %v1542
          %v1545 = vadd.f32 %v1525, %v1543
          %s1546 = sld [smem:[#allocation10 + $0x53]]
          %v1547 = vstv %s1546
          %v1548 = vmul.f32 %v1547, %v1516
          %1550 = vrot.lane.b32.xlu0 %v1548, 80
          %v1551 = vpop.permute.xlu0 %1550
          %v1552 = vrot.slane %v1551, 1
          %v1553 = vsel %vm479, %v1551, %v1552
          %v1555 = vadd.f32 %v1535, %v1553
          %s1556 = sld [smem:[#allocation10 + $0x5a]]
          %v1557 = vstv %s1556
          %v1558 = vmul.f32 %v1557, %v1516
          %1560 = vrot.lane.b32.xlu0 %v1558, 48
          %v1561 = vpop.permute.xlu0 %1560
          %v1562 = vrot.slane %v1561, 1
          %v1563 = vsel %vm500, %v1561, %v1562
          %v1565 = vadd.f32 %v1545, %v1563
          %s1566 = sld [smem:[#allocation10 + $0x61]]
          %v1567 = vstv %s1566
          %v1568 = vmul.f32 %v1567, %v1516
          %1570 = vrot.lane.b32.xlu0 %v1568, 48
          %v1571 = vpop.permute.xlu0 %1570
          %v1572 = vrot.slane %v1571, 1
          %v1573 = vsel %vm500, %v1571, %v1572
          %v1575 = vadd.f32 %v1555, %v1573
          %1577 = vrot.lane.b32.xlu0 %v1575, 112
          %v1578 = vpop.permute.xlu0 %1577
          %v1579 = vrot.slane %v1578, 1
          %v1580 = vsel %vm458, %v1578, %v1579
          %v1582 = vadd.f32 %v1565, %v1580
          %v1583 = vxor.u32 %v1582, 2147483648
          %v1584 = vmul.f32 %v1583, 1.442695
          %v1585 = vpow.pop %v1584
          %v1586 = vadd.f32 %v1585, 1.0
          %v1587 = vrcp.pop %v1586
          %v1588 = vmul.f32 %v1586, %v1587
          %v1589 = vsub.f32 1.0, %v1588
          %v1590 = vmul.f32 %v1587, %v1589
          %v1591 = vadd.f32 %v1587, %v1590
          %vm1592 = vweird.f32 %v1586
          %vm1593 = vweird.f32 %v1587
          %vm1594 = vmor %vm1592, %vm1593
          %v1595 = vsel %vm1594, %v1587, %v1591
          %v1596 = vand.u32 2147483647, %v1586
          %vm1597 = vcmp.eq.f32.partialorder %v1596, 8.507059e+37
          %v1598 = vand.u32 %v1586, 2147483648
          %v1599 = vor.u32 1.1754944e-38, %v1598
          %v1600 = vsel %vm1597, %v1599, %v1595
          %v1601 = vmul.f32 1.0, %v1600
          %1602 = vst.msk [vmem:[%s191] sm:$0x3] %vm258, %v1601
        $region44: #{tpu_custom_call.1} parent=27 // pred_fallthru
          _
        %s1603 = sand.u32 %s89, 1
        %s1604 = scalar_lea.sflag [#allocation8], %s1603
        %s1605 = sand.u32 %s89, 1
        %s1606 = smul.addr %s1605, 2
        %s1607 = scalar_lea.vmem [#allocation11], %s1606
        // Predicated region
        $region45: #{tpu_custom_call.1} parent=27 // pred_check
          %p1608 = pneg %p99
        $region46: #{tpu_custom_call.1} parent=27 // pred_check_branch
          %1610 = sbr.rel (%p1608) target = $region48
        $region47: #{tpu_custom_call.1} parent=27 // pred_region
          %1612 = vsyncadd %s1604, 0
          %s1613 = smul.addr %s24, 2
          %s1614 = scalar_lea.hbm %s2, %s1613
          %s1616 = sshll.u32 %s1607, 4
          %s1617 = int_to_ptr.vmem [resolvable:$true] %s1616
          %s1618 = sshll.u32 %s1614, 4
          %s1619 = int_to_ptr.hbm [resolvable:$true] %s1618
          %1621 = dma.vmem_to_hbm [thread:$0]  %s1617, 32, %s1619, %s1604
        $region48: #{tpu_custom_call.1} parent=27 // pred_fallthru
          _
      $region28: #{tpu_custom_call.1} parent=5 // pred_fallthru
        _
      %p1622 = scmp.le.s32.totalorder 2, %s15
      // Predicated region
      $region49: #{tpu_custom_call.1} parent=5 // pred_check
        %p1623 = pneg %p1622
      $region50: #{tpu_custom_call.1} parent=5 // pred_check_branch
        %1625 = sbr.rel (%p1623) target = $region52
      $region51: #{tpu_custom_call.1} parent=5 // pred_region
        %s1626 = ssub.s32 %s15, 2
        // Predicated region
        $region53: #{tpu_custom_call.1} parent=51 // pred_check
          %p1627 = pneg %p105
        $region54: #{tpu_custom_call.1} parent=51 // pred_check_branch
          %1629 = sbr.rel (%p1627) target = $region56
        $region55: #{tpu_custom_call.1} parent=51 // pred_region
          %s1630 = sand.u32 %s90, 1
          %s1631 = scalar_lea.sflag [#allocation8], %s1630
          %s1632 = sand.u32 %s90, 1
          %s1633 = smul.addr %s1632, 2
          %s1634 = scalar_lea.vmem [#allocation11], %s1633
          %1636 = dma.done %s1631, 32
        $region56: #{tpu_custom_call.1} parent=51 // pred_fallthru
          _
      $region52: #{tpu_custom_call.1} parent=5 // pred_fallthru
        _
    $region6: #{tpu_custom_call.1} parent=1 // loop_footer
      %s19 = sadd.s32 1, %s15
    $region7: #{tpu_custom_call.1} parent=1 // loop_footer_branch
      %14 = sbr.rel target = $region3
    $region8: #{tpu_custom_call.1} parent=1 // loop_exit
      _
    %1637 = vsyncpa [#allocation7], 1
    %s1638 = scalar_lea.sflag [#allocation7], 1
    %1639 = vsyncpa %s1638, 1
    %1640 = vsyncpa [#allocation8], 1
    %s1641 = scalar_lea.sflag [#allocation8], 1
    %1642 = vsyncpa %s1641, 1
    %1643 = vsyncpa [#allocation9], 1
    %s1644 = scalar_lea.sflag [#allocation9], 1
    %1645 = vsyncpa %s1644, 1

</llo_original>
